<compile_context>
chip_gen: v7x
topology: tpu7x:2x2x1
jax: 0.10.0
libtpu: 0.0.40
codegen_flags: <defaults>
</compile_context>

<pallas_src>
import functools
import math

import jax
import jax.numpy as jnp
from jax.experimental import pallas as pl
from jax.experimental.pallas import tpu as pltpu


# ----------------------------- weight fusion ---------------------------------

def _parity_groups(p):
    # Which original 3x3 taps (along one spatial axis) collapse onto the two
    # source offsets used by output parity p under nearest-2x upsampling.
    return ([0], [1, 2]) if p == 0 else ([0, 1], [2])


def _fuse_upsample_conv_weights(weight):
    """(Cout, Cin, 3, 3) torch-layout weight -> (9*Cin, 4*Cout) packed weight.

    Column block p = 2*pi + pj holds the fused weights for output parity
    (pi, pj); row block (dr*3 + dc) corresponds to the padded-source tap at
    offset (dr, dc).  Each parity only uses 4 of the 9 row blocks; the rest
    stay zero, which lets one matmul produce all four parities at once.
    """
    cout, cin = weight.shape[0], weight.shape[1]
    w = weight.astype(jnp.float32)
    wbig = jnp.zeros((9 * cin, 4 * cout), jnp.float32)
    for pi in range(2):
        rgs = _parity_groups(pi)
        for pj in range(2):
            cgs = _parity_groups(pj)
            p = 2 * pi + pj
            for s in range(2):
                for t in range(2):
                    dr, dc = pi + s, pj + t
                    wsum = jnp.zeros((cin, cout), jnp.float32)
                    for ky in rgs[s]:
                        for kx in cgs[t]:
                            wsum = wsum + w[:, :, ky, kx].T
                    k0 = (dr * 3 + dc) * cin
                    wbig = wbig.at[k0:k0 + cin, p * cout:(p + 1) * cout].set(wsum)
    return wbig


# --------------------------------- kernels -----------------------------------

def _fused_conv_compute(xt, w_ref, b_ref, o_ref, *, tile_rows, width, cin):
    """Shared body: xt is the halo'd (tile_rows+2, Wp, cin) bf16 source slab."""
    taps = []
    for dr in range(3):
        for dc in range(3):
            v = xt[dr:dr + tile_rows, dc:dc + width, :]          # (TR, W, Cin)
            taps.append(v.reshape(tile_rows * width, cin))       # (TR*W, Cin)
    a = jnp.concatenate(taps, axis=-1)                           # (TR*W, 9*Cin)
    acc = jnp.dot(a, w_ref[...], preferred_element_type=jnp.float32)
    o_ref[0] = (acc + b_ref[...]).astype(o_ref.dtype)            # (TR*W, 4*Cout)


def upsample_kernel(x_ref, w_ref, b_ref, o_ref, *, tile_rows, width, cin):
    """Whole-image-per-batch-element path (grid = (B,), fully pipelined)."""
    _fused_conv_compute(x_ref[0], w_ref, b_ref, o_ref,
                        tile_rows=tile_rows, width=width, cin=cin)


def upsample_kernel_halo(x_hbm, w_ref, b_ref, o_ref, xbuf, sem, *,
                         tile_rows, width, cin):
    """Row-tiled path: halo window copied straight from HBM (no wrapper gather)."""
    b = pl.program_id(0)
    t = pl.program_id(1)
    cp = pltpu.make_async_copy(
        x_hbm.at[b, pl.ds(t * tile_rows, tile_rows + 2)], xbuf, sem)
    cp.start()
    cp.wait()
    # TODO(synk): double-buffer this halo DMA (prefetch tile t+1) if the
    #             exposed copy ever shows up at very large H.
    _fused_conv_compute(xbuf[...], w_ref, b_ref, o_ref,
                        tile_rows=tile_rows, width=width, cin=cin)


# --------------------------------- wrapper ------------------------------------

def upsample_forward(x_nchw, temb, weight, bias, *, tile_rows=None,
                     vmem_budget_bytes=12 * 2**20):
    """UpSample.forward: nearest 2x upsample + Conv2d(C, C, 3, padding=1)."""
    del temb  # unused, exactly like the PyTorch module
    B, C, H, W = x_nchw.shape
    Wp = ((W + 2 + 7) // 8) * 8          # sublane-aligned padded width (>= W+2)

    def step_footprint(tr):
        inp = (tr + 2) * Wp * C * 2                   # bf16 source slab
        outp = tr * W * 4 * C * 2                     # bf16 output block
        im2col = tr * W * 9 * C * 2                   # bf16 im2col slab
        acc = tr * W * 4 * C * 4                      # f32 matmul result
        wgt = 9 * C * 4 * C * 2 + 4 * C * 4           # weight + bias
        return 2 * inp + 2 * outp + im2col + acc + 2 * wgt

    if tile_rows is None or H % tile_rows != 0:
        tile_rows = H
        for d in sorted((d for d in range(1, H + 1) if H % d == 0), reverse=True):
            if step_footprint(d) <= vmem_budget_bytes:
                tile_rows = d
                break
    TR = tile_rows
    n_tiles = H // TR

    # ---- layout glue (plain JAX) ----
    # TODO(synk): keep activations channels-last across layers to avoid the
    #             NCHW<->NHWC transposes per call.
    x_nhwc = jnp.transpose(x_nchw, (0, 2, 3, 1)).astype(jnp.bfloat16)
    xp = jnp.pad(x_nhwc, ((0, 0), (1, 1), (1, Wp - W - 1), (0, 0)))  # zero halo

    wbig = _fuse_upsample_conv_weights(weight).astype(jnp.bfloat16)
    b4 = jnp.tile(bias.astype(jnp.float32), 4).reshape(1, 4 * C)

    out_shape = jax.ShapeDtypeStruct((B, H * W, 4 * C), jnp.bfloat16)
    cost = pl.CostEstimate(
        flops=2 * B * H * W * (9 * C) * (4 * C),
        transcendentals=0,
        bytes_accessed=int(xp.size * 2 + wbig.size * 2 + b4.size * 4
                           + B * H * W * 4 * C * 2))
    cparams = pltpu.CompilerParams(
        dimension_semantics=(("parallel",) if n_tiles == 1
                             else ("parallel", "parallel")),
        vmem_limit_bytes=int(min(max(2 * step_footprint(TR), 16 * 2**20),
                                 48 * 2**20)))

    if n_tiles == 1:
        # Whole padded image per batch element; fully auto-pipelined BlockSpecs.
        grid_spec = pltpu.PrefetchScalarGridSpec(
            num_scalar_prefetch=0,
            grid=(B,),
            in_specs=[
                pl.BlockSpec((1, H + 2, Wp, C), lambda b: (b, 0, 0, 0)),
                pl.BlockSpec((9 * C, 4 * C), lambda b: (0, 0)),      # DMA'd once
                pl.BlockSpec((1, 4 * C), lambda b: (0, 0)),
            ],
            out_specs=pl.BlockSpec((1, H * W, 4 * C), lambda b: (b, 0, 0)),
        )
        kern = functools.partial(upsample_kernel, tile_rows=H, width=W, cin=C)
    else:
        # Row-tiled path: overlapping (TR+2)-row halo windows copied manually
        # from the padded HBM array (no staging gather in the wrapper).
        grid_spec = pltpu.PrefetchScalarGridSpec(
            num_scalar_prefetch=0,
            grid=(B, n_tiles),
            in_specs=[
                pl.BlockSpec(memory_space=pl.ANY),
                pl.BlockSpec((9 * C, 4 * C), lambda b, t: (0, 0)),   # DMA'd once
                pl.BlockSpec((1, 4 * C), lambda b, t: (0, 0)),
            ],
            out_specs=pl.BlockSpec((1, TR * W, 4 * C), lambda b, t: (b, t, 0)),
            scratch_shapes=[
                pltpu.VMEM((TR + 2, Wp, C), jnp.bfloat16),
                pltpu.SemaphoreType.DMA,
            ],
        )
        kern = functools.partial(upsample_kernel_halo, tile_rows=TR, width=W,
                                 cin=C)

    out = pl.pallas_call(
        kern,
        grid_spec=grid_spec,
        out_shape=out_shape,
        compiler_params=cparams,
        cost_estimate=cost,
    )(xp, wbig, b4)

    # Parity de-interleave in bf16 (one XLA transpose); cast fused into its
    # output write to match the module's dtype.
    out = out.reshape(B, H, W, 2, 2, C)
    out = jnp.transpose(out, (0, 5, 1, 3, 2, 4))          # (B, C, H, 2, W, 2)
    return out.reshape(B, C, 2 * H, 2 * W).astype(x_nchw.dtype)


# -------------------- deterministic parameter init (PyTorch-style) -----------

def _xavier_uniform(key, shape, fan_in, fan_out):
    a = math.sqrt(6.0 / (fan_in + fan_out))
    return jax.random.uniform(key, shape, jnp.float32, -a, a)


def init_params(key, in_ch):
    weight = _xavier_uniform(key, (in_ch, in_ch, 3, 3), in_ch * 9, in_ch * 9)
    bias = jnp.zeros((in_ch,), jnp.float32)                 # init.zeros_
    return weight, bias


# -------------------- pure JAX reference (NCHW, mirrors PyTorch) -------------

def reference_upsample(x, weight, bias):
    xu = jnp.repeat(jnp.repeat(x, 2, axis=2), 2, axis=3)    # nearest, scale 2
    y = jax.lax.conv_general_dilated(
        xu, weight, window_strides=(1, 1), padding="SAME",
        dimension_numbers=("NCHW", "OIHW", "NCHW"))
    return y + bias.reshape(1, -1, 1, 1)


if __name__ == "__main__":
    B, C, H, W, Td = 2, 32, 16, 16, 64

    key = jax.random.PRNGKey(0)
    kx, kt, kw, kb = jax.random.split(key, 4)
    x = jax.random.normal(kx, (B, C, H, W), jnp.float32)
    temb = jax.random.normal(kt, (B, Td), jnp.float32)
    weight, _ = init_params(kw, C)
    # Non-zero bias so the fused bias-add path is actually exercised (the
    # module's init zeros it, but forward must work for any bias).
    bias = 0.1 * jax.random.normal(kb, (C,), jnp.float32)

    ref = reference_upsample(x, weight, bias)

    # Path 1: whole-image block per batch element (auto tile choice).
    fwd = jax.jit(lambda xx, tt: upsample_forward(xx, tt, weight, bias))
    out = jax.block_until_ready(fwd(x, temb))
    assert out.shape == (B, C, 2 * H, 2 * W), out.shape
    err = float(jnp.max(jnp.abs(out - ref)))
    assert err < 5e-2, f"whole-image path max abs error {err}"

    # Path 2: row-tiled halo path (manual HBM window DMA), forced via tile_rows.
    fwd_t = jax.jit(lambda xx, tt: upsample_forward(xx, tt, weight, bias,
                                                    tile_rows=8))
    out_t = jax.block_until_ready(fwd_t(x, temb))
    err_t = float(jnp.max(jnp.abs(out_t - ref)))
    assert err_t < 5e-2, f"tiled path max abs error {err_t}"

    print("KERNEL_OK")
</pallas_src>

<mosaic_0001>
module attributes {stable_mosaic.version = 11 : i64} {
  func.func @upsample_kernel(%arg0: i32, %arg1: memref<1x18x24x32xbf16, #tpu.memory_space<vmem>>, %arg2: memref<288x128xbf16, #tpu.memory_space<vmem>>, %arg3: memref<1x128xf32, #tpu.memory_space<vmem>>, %arg4: memref<1x256x128xbf16, #tpu.memory_space<vmem>>) attributes {dimension_semantics = [#tpu.dimension_semantics<parallel>], iteration_bounds = array<i64: 2>, scalar_prefetch = 0 : i64, scratch_operands = 0 : i64, tpu.core_type = #tpu.core_type<tc>, window_params = [{transform_indices = @transform_0, window_bounds = array<i64: 1, 18, 24, 32>}, {pipeline_mode = #tpu.pipeline_mode<synchronous>, transform_indices = @transform_1, window_bounds = array<i64: 288, 128>}, {pipeline_mode = #tpu.pipeline_mode<synchronous>, transform_indices = @transform_2, window_bounds = array<i64: 1, 128>}, {transform_indices = @transform_3, window_bounds = array<i64: 1, 256, 128>}]} {
    %c0 = arith.constant 0 : index
    %c0_0 = arith.constant 0 : index
    %c0_1 = arith.constant 0 : index
    %c0_2 = arith.constant 0 : index
    %0 = vector.load %arg1[%c0, %c0_0, %c0_1, %c0_2] : memref<1x18x24x32xbf16, #tpu.memory_space<vmem>>, vector<1x18x24x32xbf16>
    %1 = vector.shape_cast %0 : vector<1x18x24x32xbf16> to vector<18x24x32xbf16>
    %2 = vector.extract_strided_slice %1 {offsets = [0, 0, 0], sizes = [16, 16, 32], strides = [1, 1, 1]} : vector<18x24x32xbf16> to vector<16x16x32xbf16>
    %3 = vector.shape_cast %2 : vector<16x16x32xbf16> to vector<256x32xbf16>
    %4 = vector.extract_strided_slice %1 {offsets = [0, 1, 0], sizes = [16, 16, 32], strides = [1, 1, 1]} : vector<18x24x32xbf16> to vector<16x16x32xbf16>
    %5 = vector.shape_cast %4 : vector<16x16x32xbf16> to vector<256x32xbf16>
    %6 = vector.extract_strided_slice %1 {offsets = [0, 2, 0], sizes = [16, 16, 32], strides = [1, 1, 1]} : vector<18x24x32xbf16> to vector<16x16x32xbf16>
    %7 = vector.shape_cast %6 : vector<16x16x32xbf16> to vector<256x32xbf16>
    %8 = vector.extract_strided_slice %1 {offsets = [1, 0, 0], sizes = [16, 16, 32], strides = [1, 1, 1]} : vector<18x24x32xbf16> to vector<16x16x32xbf16>
    %9 = vector.shape_cast %8 : vector<16x16x32xbf16> to vector<256x32xbf16>
    %10 = vector.extract_strided_slice %1 {offsets = [1, 1, 0], sizes = [16, 16, 32], strides = [1, 1, 1]} : vector<18x24x32xbf16> to vector<16x16x32xbf16>
    %11 = vector.shape_cast %10 : vector<16x16x32xbf16> to vector<256x32xbf16>
    %12 = vector.extract_strided_slice %1 {offsets = [1, 2, 0], sizes = [16, 16, 32], strides = [1, 1, 1]} : vector<18x24x32xbf16> to vector<16x16x32xbf16>
    %13 = vector.shape_cast %12 : vector<16x16x32xbf16> to vector<256x32xbf16>
    %14 = vector.extract_strided_slice %1 {offsets = [2, 0, 0], sizes = [16, 16, 32], strides = [1, 1, 1]} : vector<18x24x32xbf16> to vector<16x16x32xbf16>
    %15 = vector.shape_cast %14 : vector<16x16x32xbf16> to vector<256x32xbf16>
    %16 = vector.extract_strided_slice %1 {offsets = [2, 1, 0], sizes = [16, 16, 32], strides = [1, 1, 1]} : vector<18x24x32xbf16> to vector<16x16x32xbf16>
    %17 = vector.shape_cast %16 : vector<16x16x32xbf16> to vector<256x32xbf16>
    %18 = vector.extract_strided_slice %1 {offsets = [2, 2, 0], sizes = [16, 16, 32], strides = [1, 1, 1]} : vector<18x24x32xbf16> to vector<16x16x32xbf16>
    %19 = vector.shape_cast %18 : vector<16x16x32xbf16> to vector<256x32xbf16>
    %20 = tpu.concatenate %3, %5, %7, %9, %11, %13, %15, %17, %19 in 1 : vector<256x32xbf16>, vector<256x32xbf16>, vector<256x32xbf16>, vector<256x32xbf16>, vector<256x32xbf16>, vector<256x32xbf16>, vector<256x32xbf16>, vector<256x32xbf16>, vector<256x32xbf16> -> vector<256x288xbf16>
    %c0_3 = arith.constant 0 : index
    %c0_4 = arith.constant 0 : index
    %21 = vector.load %arg2[%c0_3, %c0_4] : memref<288x128xbf16, #tpu.memory_space<vmem>>, vector<288x128xbf16>
    %cst = arith.constant dense<0.000000e+00> : vector<256x128xf32>
    %22 = tpu.matmul %20, %21, %cst {dimension_numbers = #tpu.dot_dimension_numbers<[1], [0], [0], [1], [0, 0, 1, 1], [], []>} : vector<256x288xbf16>, vector<288x128xbf16>, vector<256x128xf32> -> vector<256x128xf32>
    %c0_5 = arith.constant 0 : index
    %c0_6 = arith.constant 0 : index
    %23 = vector.load %arg3[%c0_5, %c0_6] : memref<1x128xf32, #tpu.memory_space<vmem>>, vector<1x128xf32>
    %24 = vector.broadcast %23 : vector<1x128xf32> to vector<256x128xf32>
    %25 = arith.addf %22, %24 : vector<256x128xf32>
    %26 = arith.truncf %25 : vector<256x128xf32> to vector<256x128xbf16>
    %c0_7 = arith.constant 0 : index
    %c0_8 = arith.constant 0 : index
    %c0_9 = arith.constant 0 : index
    %27 = vector.load %arg4[%c0_7, %c0_8, %c0_9] : memref<1x256x128xbf16, #tpu.memory_space<vmem>>, vector<1x256x128xbf16>
    %28 = vector.shape_cast %27 : vector<1x256x128xbf16> to vector<256x128xbf16>
    %29 = vector.shape_cast %26 : vector<256x128xbf16> to vector<1x256x128xbf16>
    tpu.vector_store %arg4[%c0_7, %c0_8, %c0_9], %29 {strides = array<i32>} : memref<1x256x128xbf16, #tpu.memory_space<vmem>>, vector<1x256x128xbf16>,
    return
  }
  func.func @transform_0(%arg0: i32) -> (i32, i32, i32, i32) {
    %c0_i32 = arith.constant 0 : i32
    %c0_i32_0 = arith.constant 0 : i32
    %c0_i32_1 = arith.constant 0 : i32
    %c0_i32_2 = arith.constant 0 : i32
    return %arg0, %c0_i32, %c0_i32_0, %c0_i32_1 : i32, i32, i32, i32
  }
  func.func @transform_1(%arg0: i32) -> (i32, i32) {
    %c0_i32 = arith.constant 0 : i32
    %c0_i32_0 = arith.constant 0 : i32
    %c0_i32_1 = arith.constant 0 : i32
    return %c0_i32, %c0_i32_0 : i32, i32
  }
  func.func @transform_2(%arg0: i32) -> (i32, i32) {
    %c0_i32 = arith.constant 0 : i32
    %c0_i32_0 = arith.constant 0 : i32
    %c0_i32_1 = arith.constant 0 : i32
    return %c0_i32, %c0_i32_0 : i32, i32
  }
  func.func @transform_3(%arg0: i32) -> (i32, i32, i32) {
    %c0_i32 = arith.constant 0 : i32
    %c0_i32_0 = arith.constant 0 : i32
    %c0_i32_1 = arith.constant 0 : i32
    return %arg0, %c0_i32, %c0_i32_0 : i32, i32, i32
  }
}

</mosaic_0001>

<llo_original>
// kernel: tile.6
$region0: #{tile.6}
  #allocation0 [shape = 's32[1]{0}', space=sflag, size = 0x4, scoped, tag = 'scoped memory for tile.6']
  %s0 = inlined_call_operand.vmem [shape: f32[32], index: 0, kind: input, shape index: {}]
  %s1 = inlined_call_operand.vmem [shape: f32[4,32], index: 1, kind: output, shape index: {}]
  // Predicated region
  $region2: #{tile.6} parent=0 // pred_check
    _
  $region3: #{tile.6} parent=0 // pred_check_branch
    %3 = sbr.rel (0) target = $region5
  $region4: #{tile.6} parent=0 // pred_region
    _
  $region5: #{tile.6} parent=0 // pred_fallthru
    _
  %v4 = vld [vmem:[%s0] ss:$0 sm:$0xff]
  %5 = vst [vmem:[%s1] sm:$0xf] %v4

// kernel: tile.7
$region0: #{tile.7}
  %s0 = inlined_call_operand.vmem [shape: f32[4,32], index: 0, kind: input, shape index: {}]
  %s1 = inlined_call_operand.vmem [shape: f32[1,128], index: 1, kind: output, shape index: {}]
  $region1: #{tile.7} parent=0
    #allocation0 [shape = 'u8[4096]{0}', space=vmem, size = 0x1000, scoped, tag = 'scoped mem for output reshape']
    #allocation1 [shape = 'u8[4096]{0}', space=vmem, size = 0x1000, scoped, tag = 'scoped mem for input reshape']
    %s3 = sshllo.u32 0, 4
    %v4 = vld [vmem:[%s0] sm:%s3]
    %5 = vst [vmem:[#allocation1] sm:%s3] %v4
    %v6 = vld [vmem:[#allocation1] sm:$0x1]
    %vm7 = vcmask 261120
    %8 = vst.msk [vmem:[#allocation0] sm:$0x1] %vm7, %v6
    %s9 = scalar_lea.vmem [#allocation1], 3
    %v10 = vld [vmem:[%s9] sm:$0x1]
    %11 = vrot.lane.b32.xlu0 %v10, 96
    %v12 = vpop.permute.xlu0 %11
    %vm13 = vcmask 1048320
    %14 = vst.msk [vmem:[#allocation0] sm:$0x1] %vm13, %v12
    %s15 = scalar_lea.vmem [#allocation1], 2
    %v16 = vld [vmem:[%s15] sm:$0x1]
    %17 = vrot.lane.b32.xlu0 %v16, 64
    %v18 = vpop.permute.xlu0 %17
    %vm19 = vcmask 785920
    %20 = vst.msk [vmem:[#allocation0] sm:$0x1] %vm19, %v18
    %s21 = scalar_lea.vmem [#allocation1], 1
    %v22 = vld [vmem:[%s21] sm:$0x1]
    %23 = vrot.lane.b32.xlu0 %v22, 32
    %v24 = vpop.permute.xlu0 %23
    %vm25 = vcmask 523520
    %26 = vst.msk [vmem:[#allocation0] sm:$0x1] %vm25, %v24
    %s28 = sshllo.u32 0, 1
    %v30 = vld [vmem:[#allocation0] sm:%s28]
    %s31 = sshllo.u32 0, 1
    %32 = vst [vmem:[%s1] sm:%s31] %v30

// kernel: _lambda_.1
$region0: #{_lambda_.1}
  #allocation0 [shape = 'u32[]', space=smem, size = 0x4, offset = 0x4, fixed_abs, tag = 'smem constant byte address 0x4 - core index']
  #allocation1 [shape = 'u32[144,128]{1,0:T(1,128)}', space=vmem, size = 0x12000, scoped, tag = 'internal scratch']
  %s0 = inlined_call_operand.vmem [shape: bf16[2,18,24,32], index: 0, kind: input, shape index: {}]
  %s1 = inlined_call_operand.vmem [shape: bf16[288,128], index: 1, kind: input, shape index: {}]
  %s2 = inlined_call_operand.vmem [shape: f32[1,128], index: 2, kind: input, shape index: {}]
  %s3 = inlined_call_operand.vmem [shape: bf16[2,256,128], index: 3, kind: output, shape index: {}]
  %s4 = sld [smem:[#allocation0]]
  $region45: #{_lambda_.1} parent=0
    _
  %s6 = ssub.s32 1, %s4
  %s7 = scalar_select 0, %s6, %s4
  loop: start=0, step=1, limit=4
  $region2: #{_lambda_.1} parent=0 // loop_pre_header
    _
  $region3: #{_lambda_.1} parent=0 // loop_header
    %s9 = sphi 0, %s13
    %p10 = scmp.ge.s32.totalorder %s9, 4
    %s19 = sphi 0, %s21
    %s22 = sphi 0, %s19
    %s23 = sphi 0, %s22
    %s39 = sphi 0, %s23
    %s43 = sphi 0, %s43
    %s45 = sphi 0, %s43
    %s46 = sphi 0, %s45
    %s60 = sphi 0, %s46
    %s64 = sphi 0, %s64
    %s66 = sphi 0, %s64
    %s67 = sphi 0, %s66
    %s81 = sphi 0, %s67
    %s87 = sphi 0, %s89
    %s90 = sphi 0, %s87
    %s91 = sphi 0, %s90
    %s107 = sphi 0, %s91
  $region4: #{_lambda_.1} parent=0 // loop_header_branch
    %12 = sbr.rel (%p10) target = $region8
  $region5: #{_lambda_.1} parent=0 // loop_body
    %s14 = ssub.s32 %s9, 1
    %s15 = ssub.s32 %s9, 2
    %s16 = sadd.s32 %s9, 1
    %s17 = ssub.s32 %s9, %s16
    %p18 = scmp.eq.s32.totalorder %s17, 0
    %s20 = sadd.s32 %s19, 1
    %s21 = scalar_select %p18, %s19, %s20
    %p24 = pneg %p18
    %p25 = scmp.eq.s32.totalorder %s9, 1
    %p26 = por %p24, %p25
    %p27 = scmp.ne.s32.totalorder %s19, %s22
    %p28 = scmp.eq.s32.totalorder %s9, 0
    %p29 = por %p27, %p28
    %p30 = scmp.ne.s32.totalorder %s19, %s22
    %p31 = scmp.eq.s32.totalorder %s14, 1
    %p32 = por %p30, %p31
    %p33 = scmp.ne.s32.totalorder %s22, %s23
    %p34 = scmp.eq.s32.totalorder %s14, 0
    %p35 = por %p33, %p34
    %p36 = scmp.ne.s32.totalorder %s22, %s23
    %p37 = scmp.eq.s32.totalorder %s15, 1
    %p38 = por %p36, %p37
    %p40 = scmp.ne.s32.totalorder %s23, %s39
    %p41 = scmp.eq.s32.totalorder %s15, 0
    %p42 = por %p40, %p41
    %s44 = sadd.s32 %s43, 1
    %p47 = scmp.eq.s32.totalorder %s9, 1
    %p48 = scmp.ne.s32.totalorder %s43, %s45
    %p49 = scmp.eq.s32.totalorder %s9, 0
    %p50 = por %p48, %p49
    %p51 = scmp.ne.s32.totalorder %s43, %s45
    %p52 = scmp.eq.s32.totalorder %s14, 1
    %p53 = por %p51, %p52
    %p54 = scmp.ne.s32.totalorder %s45, %s46
    %p55 = scmp.eq.s32.totalorder %s14, 0
    %p56 = por %p54, %p55
    %p57 = scmp.ne.s32.totalorder %s45, %s46
    %p58 = scmp.eq.s32.totalorder %s15, 1
    %p59 = por %p57, %p58
    %p61 = scmp.ne.s32.totalorder %s46, %s60
    %p62 = scmp.eq.s32.totalorder %s15, 0
    %p63 = por %p61, %p62
    %s65 = sadd.s32 %s64, 1
    %p68 = scmp.eq.s32.totalorder %s9, 1
    %p69 = scmp.ne.s32.totalorder %s64, %s66
    %p70 = scmp.eq.s32.totalorder %s9, 0
    %p71 = por %p69, %p70
    %p72 = scmp.ne.s32.totalorder %s64, %s66
    %p73 = scmp.eq.s32.totalorder %s14, 1
    %p74 = por %p72, %p73
    %p75 = scmp.ne.s32.totalorder %s66, %s67
    %p76 = scmp.eq.s32.totalorder %s14, 0
    %p77 = por %p75, %p76
    %p78 = scmp.ne.s32.totalorder %s66, %s67
    %p79 = scmp.eq.s32.totalorder %s15, 1
    %p80 = por %p78, %p79
    %p82 = scmp.ne.s32.totalorder %s67, %s81
    %p83 = scmp.eq.s32.totalorder %s15, 0
    %p84 = por %p82, %p83
    %s85 = ssub.s32 %s9, %s16
    %p86 = scmp.eq.s32.totalorder %s85, 0
    %s88 = sadd.s32 %s87, 1
    %s89 = scalar_select %p86, %s87, %s88
    %p92 = pneg %p86
    %p93 = scmp.eq.s32.totalorder %s9, 1
    %p94 = por %p92, %p93
    %p95 = scmp.ne.s32.totalorder %s87, %s90
    %p96 = scmp.eq.s32.totalorder %s9, 0
    %p97 = por %p95, %p96
    %p98 = scmp.ne.s32.totalorder %s87, %s90
    %p99 = scmp.eq.s32.totalorder %s14, 1
    %p100 = por %p98, %p99
    %p101 = scmp.ne.s32.totalorder %s90, %s91
    %p102 = scmp.eq.s32.totalorder %s14, 0
    %p103 = por %p101, %p102
    %p104 = scmp.ne.s32.totalorder %s90, %s91
    %p105 = scmp.eq.s32.totalorder %s15, 1
    %p106 = por %p104, %p105
    %p108 = scmp.ne.s32.totalorder %s91, %s107
    %p109 = scmp.eq.s32.totalorder %s15, 0
    %p110 = por %p108, %p109
    %p111 = scmp.le.s32.totalorder 1, %s9
    %p112 = scmp.lt.s32.totalorder %s9, 3
    %p113 = pnand %p111, %p112
    %p114 = pneg %p113
    // Predicated region
    $region9: #{_lambda_.1} parent=5 // pred_check
      _
    $region10: #{_lambda_.1} parent=5 // pred_check_branch
      %116 = sbr.rel (%p113) target = $region12
    $region11: #{_lambda_.1} parent=5 // pred_region
      %s117 = ssub.s32 %s9, 1
      // Predicated region
      $region13: #{_lambda_.1} parent=11 // pred_check
        %p118 = pneg %p56
      $region14: #{_lambda_.1} parent=11 // pred_check_branch
        %120 = sbr.rel (%p118) target = $region16
      $region15: #{_lambda_.1} parent=11 // pred_region
        _
      $region16: #{_lambda_.1} parent=11 // pred_fallthru
        _
      // Predicated region
      $region17: #{_lambda_.1} parent=11 // pred_check
        %p121 = pneg %p77
      $region18: #{_lambda_.1} parent=11 // pred_check_branch
        %123 = sbr.rel (%p121) target = $region20
      $region19: #{_lambda_.1} parent=11 // pred_region
        _
      $region20: #{_lambda_.1} parent=11 // pred_fallthru
        _
    $region12: #{_lambda_.1} parent=5 // pred_fallthru
      _
    %p124 = scmp.lt.s32.totalorder %s9, 2
    // Predicated region
    $region21: #{_lambda_.1} parent=5 // pred_check
      %p125 = pneg %p124
    $region22: #{_lambda_.1} parent=5 // pred_check_branch
      %127 = sbr.rel (%p125) target = $region24
    $region23: #{_lambda_.1} parent=5 // pred_region
      // Predicated region
      $region25: #{_lambda_.1} parent=23 // pred_check
        %p128 = pneg %p29
      $region26: #{_lambda_.1} parent=23 // pred_check_branch
        %130 = sbr.rel (%p128) target = $region28
      $region27: #{_lambda_.1} parent=23 // pred_region
        %p131 = scmp.lt.s32.totalorder %s9, 1
        %s132 = scalar_select %p131, %s9, 1
        %s133 = smul.addr %s132, 54
        %s134 = smul.addr %s133, 4
        %s135 = scalar_lea.vmem %s0, %s134
      $region28: #{_lambda_.1} parent=23 // pred_fallthru
        _
    $region24: #{_lambda_.1} parent=5 // pred_fallthru
      _
    %p136 = scmp.le.s32.totalorder 1, %s9
    %p137 = scmp.lt.s32.totalorder %s9, 3
    %p138 = pnand %p136, %p137
    %p139 = pneg %p138
    // Predicated region
    $region29: #{_lambda_.1} parent=5 // pred_check
      _
    $region30: #{_lambda_.1} parent=5 // pred_check_branch
      %141 = sbr.rel (%p138) target = $region32
    $region31: #{_lambda_.1} parent=5 // pred_region
      %s142 = ssub.s32 %s9, 1
      %p143 = scmp.lt.s32.totalorder %s14, 1
      %s144 = scalar_select %p143, %s14, 1
      %s145 = smul.addr %s144, 54
      %s146 = smul.addr %s145, 4
      %s147 = scalar_lea.vmem %s0, %s146
      %p148 = pneg %p35
      %p149 = pneg %p32
      %p150 = pneg %p56
      %p151 = pneg %p53
      %p152 = pneg %p77
      %p153 = pneg %p74
      %p154 = pneg %p103
      %p155 = pneg %p100
      %p156 = scmp.lt.s32.totalorder %s14, 1
      %s157 = scalar_select %p156, %s14, 1
      %s158 = smul.addr %s157, 32
      %s159 = smul.addr %s158, 4
      %s160 = scalar_lea.vmem %s3, %s159
      %p161 = scmp.lt.s32.totalorder %s14, 1
      %s162 = scalar_select %p161, %s14, 1
      %s163 = smul.addr %s162, 54
      %s164 = smul.addr %s163, 4
      %s165 = scalar_lea.vmem %s0, %s164
      %p166 = scmp.lt.s32.totalorder %s14, 1
      %s167 = scalar_select %p166, %s14, 1
      %s168 = smul.addr %s167, 32
      %s169 = smul.addr %s168, 4
      %s170 = scalar_lea.vmem %s3, %s169
      %v172 = vld [vmem:[%s165] sm:$0xf]
      %v173 = vld [vmem:[%s165 + $0x4] sm:$0xf]
      %v174 = vld [vmem:[%s165 + $0x8] sm:$0xf]
      %v175 = vld [vmem:[%s165 + $0xc] sm:$0xf]
      %v176 = vld [vmem:[%s165 + $0x10] sm:$0xf]
      %v177 = vld [vmem:[%s165 + $0x14] sm:$0xf]
      %v178 = vld [vmem:[%s165 + $0x18] sm:$0xf]
      %v179 = vld [vmem:[%s165 + $0x1c] sm:$0xf]
      %v180 = vld [vmem:[%s165 + $0x20] sm:$0xf]
      %v181 = vld [vmem:[%s165 + $0x24] sm:$0xf]
      %v182 = vld [vmem:[%s165 + $0x28] sm:$0xf]
      %v183 = vld [vmem:[%s165 + $0x2c] sm:$0xf]
      %v184 = vld [vmem:[%s165 + $0x30] sm:$0xf]
      %v185 = vld [vmem:[%s165 + $0x34] sm:$0xf]
      %v186 = vld [vmem:[%s165 + $0x38] sm:$0xf]
      %v187 = vld [vmem:[%s165 + $0x3c] sm:$0xf]
      %v188 = vld [vmem:[%s165 + $0x40] sm:$0xf]
      %v189 = vld [vmem:[%s165 + $0x44] sm:$0xf]
      %v190 = vld [vmem:[%s165 + $0x48] sm:$0xf]
      %v191 = vld [vmem:[%s165 + $0x4c] sm:$0xf]
      %v192 = vld [vmem:[%s165 + $0x50] sm:$0xf]
      %v193 = vld [vmem:[%s165 + $0x54] sm:$0xf]
      %v194 = vld [vmem:[%s165 + $0x58] sm:$0xf]
      %v195 = vld [vmem:[%s165 + $0x5c] sm:$0xf]
      %v196 = vld [vmem:[%s165 + $0x60] sm:$0xf]
      %v197 = vld [vmem:[%s165 + $0x64] sm:$0xf]
      %v198 = vld [vmem:[%s165 + $0x68] sm:$0xf]
      %v199 = vld [vmem:[%s165 + $0x6c] sm:$0xf]
      %v200 = vld [vmem:[%s165 + $0x70] sm:$0xf]
      %v201 = vld [vmem:[%s165 + $0x74] sm:$0xf]
      %v202 = vld [vmem:[%s165 + $0x78] sm:$0xf]
      %v203 = vld [vmem:[%s165 + $0x7c] sm:$0xf]
      %v204 = vld [vmem:[%s165 + $0x80] sm:$0xf]
      %v205 = vld [vmem:[%s165 + $0x84] sm:$0xf]
      %v206 = vld [vmem:[%s165 + $0x88] sm:$0xf]
      %v207 = vld [vmem:[%s165 + $0x8c] sm:$0xf]
      %v208 = vld [vmem:[%s165 + $0x90] sm:$0xf]
      %v209 = vld [vmem:[%s165 + $0x94] sm:$0xf]
      %v210 = vld [vmem:[%s165 + $0x98] sm:$0xf]
      %v211 = vld [vmem:[%s165 + $0x9c] sm:$0xf]
      %v212 = vld [vmem:[%s165 + $0xa0] sm:$0xf]
      %v213 = vld [vmem:[%s165 + $0xa4] sm:$0xf]
      %v214 = vld [vmem:[%s165 + $0xa8] sm:$0xf]
      %v215 = vld [vmem:[%s165 + $0xac] sm:$0xf]
      %v216 = vld [vmem:[%s165 + $0xb0] sm:$0xf]
      %v217 = vld [vmem:[%s165 + $0xb4] sm:$0xf]
      %v218 = vld [vmem:[%s165 + $0xb8] sm:$0xf]
      %v219 = vld [vmem:[%s165 + $0xbc] sm:$0xf]
      %v220 = vld [vmem:[%s165 + $0xc0] sm:$0xf]
      %v221 = vld [vmem:[%s165 + $0xc4] sm:$0xf]
      %v222 = vld [vmem:[%s165 + $0xc8] sm:$0xf]
      %v223 = vld [vmem:[%s165 + $0xcc] sm:$0xf]
      %v224 = vld [vmem:[%s165 + $0xd0] sm:$0xf]
      %v225 = vld [vmem:[%s165 + $0xd4] sm:$0xf]
      %vm226 = vsmask.f32 3328
      %vm227 = vsmask.f32 7440
      %vm228 = vmor %vm226, %vm227
      %v230 = vshrl.u32 %v172, 16
      %v232 = vrot.slane %v230, 4
      %v233 = vshll.u32 %v172, 16
      %v235 = vrot.slane %v233, 5
      %v236 = vor.u32 %v232, %v235
      %v237 = vrot.slane %v236, 4
      %v239 = vshll.u32 %v173, 16
      %v241 = vrot.slane %v239, 5
      %v242 = vsel %vm228, %v237, %v241
      %v243 = vshrl.u32 %v173, 16
      %v245 = vrot.slane %v243, 4
      %v246 = vor.u32 %v245, %v241
      %v247 = vrot.slane %v246, 4
      %v249 = vshll.u32 %v174, 16
      %v251 = vrot.slane %v249, 5
      %v252 = vsel %vm228, %v247, %v251
      %v254 = vshrl.u32 %v175, 16
      %v256 = vrot.slane %v254, 4
      %v257 = vshll.u32 %v175, 16
      %v259 = vrot.slane %v257, 5
      %v260 = vor.u32 %v256, %v259
      %v261 = vrot.slane %v260, 4
      %v263 = vshll.u32 %v176, 16
      %v265 = vrot.slane %v263, 5
      %v266 = vsel %vm228, %v261, %v265
      %v267 = vshrl.u32 %v176, 16
      %v269 = vrot.slane %v267, 4
      %v270 = vor.u32 %v269, %v265
      %v271 = vrot.slane %v270, 4
      %v273 = vshll.u32 %v177, 16
      %v275 = vrot.slane %v273, 5
      %v276 = vsel %vm228, %v271, %v275
      %v278 = vshrl.u32 %v178, 16
      %v280 = vrot.slane %v278, 4
      %v281 = vshll.u32 %v178, 16
      %v283 = vrot.slane %v281, 5
      %v284 = vor.u32 %v280, %v283
      %v285 = vrot.slane %v284, 4
      %v287 = vshll.u32 %v179, 16
      %v289 = vrot.slane %v287, 5
      %v290 = vsel %vm228, %v285, %v289
      %v291 = vshrl.u32 %v179, 16
      %v293 = vrot.slane %v291, 4
      %v294 = vor.u32 %v293, %v289
      %v295 = vrot.slane %v294, 4
      %v297 = vshll.u32 %v180, 16
      %v299 = vrot.slane %v297, 5
      %v300 = vsel %vm228, %v295, %v299
      %v302 = vshrl.u32 %v181, 16
      %v304 = vrot.slane %v302, 4
      %v305 = vshll.u32 %v181, 16
      %v307 = vrot.slane %v305, 5
      %v308 = vor.u32 %v304, %v307
      %v309 = vrot.slane %v308, 4
      %v311 = vshll.u32 %v182, 16
      %v313 = vrot.slane %v311, 5
      %v314 = vsel %vm228, %v309, %v313
      %v315 = vshrl.u32 %v182, 16
      %v317 = vrot.slane %v315, 4
      %v318 = vor.u32 %v317, %v313
      %v319 = vrot.slane %v318, 4
      %v321 = vshll.u32 %v183, 16
      %v323 = vrot.slane %v321, 5
      %v324 = vsel %vm228, %v319, %v323
      %v326 = vshrl.u32 %v184, 16
      %v328 = vrot.slane %v326, 4
      %v329 = vshll.u32 %v184, 16
      %v331 = vrot.slane %v329, 5
      %v332 = vor.u32 %v328, %v331
      %v333 = vrot.slane %v332, 4
      %v335 = vshll.u32 %v185, 16
      %v337 = vrot.slane %v335, 5
      %v338 = vsel %vm228, %v333, %v337
      %v339 = vshrl.u32 %v185, 16
      %v341 = vrot.slane %v339, 4
      %v342 = vor.u32 %v341, %v337
      %v343 = vrot.slane %v342, 4
      %v345 = vshll.u32 %v186, 16
      %v347 = vrot.slane %v345, 5
      %v348 = vsel %vm228, %v343, %v347
      %v350 = vshrl.u32 %v187, 16
      %v352 = vrot.slane %v350, 4
      %v353 = vshll.u32 %v187, 16
      %v355 = vrot.slane %v353, 5
      %v356 = vor.u32 %v352, %v355
      %v357 = vrot.slane %v356, 4
      %v359 = vshll.u32 %v188, 16
      %v361 = vrot.slane %v359, 5
      %v362 = vsel %vm228, %v357, %v361
      %v363 = vshrl.u32 %v188, 16
      %v365 = vrot.slane %v363, 4
      %v366 = vor.u32 %v365, %v361
      %v367 = vrot.slane %v366, 4
      %v369 = vshll.u32 %v189, 16
      %v371 = vrot.slane %v369, 5
      %v372 = vsel %vm228, %v367, %v371
      %v374 = vshrl.u32 %v190, 16
      %v376 = vrot.slane %v374, 4
      %v377 = vshll.u32 %v190, 16
      %v379 = vrot.slane %v377, 5
      %v380 = vor.u32 %v376, %v379
      %v381 = vrot.slane %v380, 4
      %v383 = vshll.u32 %v191, 16
      %v385 = vrot.slane %v383, 5
      %v386 = vsel %vm228, %v381, %v385
      %v387 = vshrl.u32 %v191, 16
      %v389 = vrot.slane %v387, 4
      %v390 = vor.u32 %v389, %v385
      %v391 = vrot.slane %v390, 4
      %v393 = vshll.u32 %v192, 16
      %v395 = vrot.slane %v393, 5
      %v396 = vsel %vm228, %v391, %v395
      %v398 = vshrl.u32 %v193, 16
      %v400 = vrot.slane %v398, 4
      %v401 = vshll.u32 %v193, 16
      %v403 = vrot.slane %v401, 5
      %v404 = vor.u32 %v400, %v403
      %v405 = vrot.slane %v404, 4
      %v407 = vshll.u32 %v194, 16
      %v409 = vrot.slane %v407, 5
      %v410 = vsel %vm228, %v405, %v409
      %v411 = vshrl.u32 %v194, 16
      %v413 = vrot.slane %v411, 4
      %v414 = vor.u32 %v413, %v409
      %v415 = vrot.slane %v414, 4
      %v417 = vshll.u32 %v195, 16
      %v419 = vrot.slane %v417, 5
      %v420 = vsel %vm228, %v415, %v419
      %v422 = vshrl.u32 %v196, 16
      %v424 = vrot.slane %v422, 4
      %v425 = vshll.u32 %v196, 16
      %v427 = vrot.slane %v425, 5
      %v428 = vor.u32 %v424, %v427
      %v429 = vrot.slane %v428, 4
      %v431 = vshll.u32 %v197, 16
      %v433 = vrot.slane %v431, 5
      %v434 = vsel %vm228, %v429, %v433
      %v435 = vshrl.u32 %v197, 16
      %v437 = vrot.slane %v435, 4
      %v438 = vor.u32 %v437, %v433
      %v439 = vrot.slane %v438, 4
      %v441 = vshll.u32 %v198, 16
      %v443 = vrot.slane %v441, 5
      %v444 = vsel %vm228, %v439, %v443
      %v446 = vshrl.u32 %v199, 16
      %v448 = vrot.slane %v446, 4
      %v449 = vshll.u32 %v199, 16
      %v451 = vrot.slane %v449, 5
      %v452 = vor.u32 %v448, %v451
      %v453 = vrot.slane %v452, 4
      %v455 = vshll.u32 %v200, 16
      %v457 = vrot.slane %v455, 5
      %v458 = vsel %vm228, %v453, %v457
      %v459 = vshrl.u32 %v200, 16
      %v461 = vrot.slane %v459, 4
      %v462 = vor.u32 %v461, %v457
      %v463 = vrot.slane %v462, 4
      %v465 = vshll.u32 %v201, 16
      %v467 = vrot.slane %v465, 5
      %v468 = vsel %vm228, %v463, %v467
      %v470 = vshrl.u32 %v202, 16
      %v472 = vrot.slane %v470, 4
      %v473 = vshll.u32 %v202, 16
      %v475 = vrot.slane %v473, 5
      %v476 = vor.u32 %v472, %v475
      %v477 = vrot.slane %v476, 4
      %v479 = vshll.u32 %v203, 16
      %v481 = vrot.slane %v479, 5
      %v482 = vsel %vm228, %v477, %v481
      %v483 = vshrl.u32 %v203, 16
      %v485 = vrot.slane %v483, 4
      %v486 = vor.u32 %v485, %v481
      %v487 = vrot.slane %v486, 4
      %v489 = vshll.u32 %v204, 16
      %v491 = vrot.slane %v489, 5
      %v492 = vsel %vm228, %v487, %v491
      %v494 = vshrl.u32 %v205, 16
      %v496 = vrot.slane %v494, 4
      %v497 = vshll.u32 %v205, 16
      %v499 = vrot.slane %v497, 5
      %v500 = vor.u32 %v496, %v499
      %v501 = vrot.slane %v500, 4
      %v503 = vshll.u32 %v206, 16
      %v505 = vrot.slane %v503, 5
      %v506 = vsel %vm228, %v501, %v505
      %v507 = vshrl.u32 %v206, 16
      %v509 = vrot.slane %v507, 4
      %v510 = vor.u32 %v509, %v505
      %v511 = vrot.slane %v510, 4
      %v513 = vshll.u32 %v207, 16
      %v515 = vrot.slane %v513, 5
      %v516 = vsel %vm228, %v511, %v515
      %v518 = vshrl.u32 %v208, 16
      %v520 = vrot.slane %v518, 4
      %v521 = vshll.u32 %v208, 16
      %v523 = vrot.slane %v521, 5
      %v524 = vor.u32 %v520, %v523
      %v525 = vrot.slane %v524, 4
      %v527 = vshll.u32 %v209, 16
      %v529 = vrot.slane %v527, 5
      %v530 = vsel %vm228, %v525, %v529
      %v531 = vshrl.u32 %v209, 16
      %v533 = vrot.slane %v531, 4
      %v534 = vor.u32 %v533, %v529
      %v535 = vrot.slane %v534, 4
      %v537 = vshll.u32 %v210, 16
      %v539 = vrot.slane %v537, 5
      %v540 = vsel %vm228, %v535, %v539
      %v542 = vshrl.u32 %v211, 16
      %v544 = vrot.slane %v542, 4
      %v545 = vshll.u32 %v211, 16
      %v547 = vrot.slane %v545, 5
      %v548 = vor.u32 %v544, %v547
      %v549 = vrot.slane %v548, 4
      %v551 = vshll.u32 %v212, 16
      %v553 = vrot.slane %v551, 5
      %v554 = vsel %vm228, %v549, %v553
      %v555 = vshrl.u32 %v212, 16
      %v557 = vrot.slane %v555, 4
      %v558 = vor.u32 %v557, %v553
      %v559 = vrot.slane %v558, 4
      %v561 = vshll.u32 %v213, 16
      %v563 = vrot.slane %v561, 5
      %v564 = vsel %vm228, %v559, %v563
      %v566 = vshrl.u32 %v214, 16
      %v568 = vrot.slane %v566, 4
      %v569 = vshll.u32 %v214, 16
      %v571 = vrot.slane %v569, 5
      %v572 = vor.u32 %v568, %v571
      %v573 = vrot.slane %v572, 4
      %v575 = vshll.u32 %v215, 16
      %v577 = vrot.slane %v575, 5
      %v578 = vsel %vm228, %v573, %v577
      %v579 = vshrl.u32 %v215, 16
      %v581 = vrot.slane %v579, 4
      %v582 = vor.u32 %v581, %v577
      %v583 = vrot.slane %v582, 4
      %v585 = vshll.u32 %v216, 16
      %v587 = vrot.slane %v585, 5
      %v588 = vsel %vm228, %v583, %v587
      %v590 = vshrl.u32 %v217, 16
      %v592 = vrot.slane %v590, 4
      %v593 = vshll.u32 %v217, 16
      %v595 = vrot.slane %v593, 5
      %v596 = vor.u32 %v592, %v595
      %v597 = vrot.slane %v596, 4
      %v599 = vshll.u32 %v218, 16
      %v601 = vrot.slane %v599, 5
      %v602 = vsel %vm228, %v597, %v601
      %v603 = vshrl.u32 %v218, 16
      %v605 = vrot.slane %v603, 4
      %v606 = vor.u32 %v605, %v601
      %v607 = vrot.slane %v606, 4
      %v609 = vshll.u32 %v219, 16
      %v611 = vrot.slane %v609, 5
      %v612 = vsel %vm228, %v607, %v611
      %vm661 = vcmask 1042432
      %vm662 = vcmask 1046532
      %vm663 = vmor %vm661, %vm662
      %v664 = vrot.slane %v172, 5
      %v665 = vrot.slane %v664, 4
      %v666 = vrot.slane %v173, 5
      %v667 = vsel %vm663, %v665, %v666
      %v668 = vrot.slane %v666, 4
      %v669 = vrot.slane %v174, 5
      %v670 = vsel %vm663, %v668, %v669
      %v671 = vrot.slane %v175, 5
      %v672 = vrot.slane %v671, 4
      %v673 = vrot.slane %v176, 5
      %v674 = vsel %vm663, %v672, %v673
      %v675 = vrot.slane %v673, 4
      %v676 = vrot.slane %v177, 5
      %v677 = vsel %vm663, %v675, %v676
      %v678 = vrot.slane %v178, 5
      %v679 = vrot.slane %v678, 4
      %v680 = vrot.slane %v179, 5
      %v681 = vsel %vm663, %v679, %v680
      %v682 = vrot.slane %v680, 4
      %v683 = vrot.slane %v180, 5
      %v684 = vsel %vm663, %v682, %v683
      %v685 = vrot.slane %v181, 5
      %v686 = vrot.slane %v685, 4
      %v687 = vrot.slane %v182, 5
      %v688 = vsel %vm663, %v686, %v687
      %v689 = vrot.slane %v687, 4
      %v690 = vrot.slane %v183, 5
      %v691 = vsel %vm663, %v689, %v690
      %v692 = vrot.slane %v184, 5
      %v693 = vrot.slane %v692, 4
      %v694 = vrot.slane %v185, 5
      %v695 = vsel %vm663, %v693, %v694
      %v696 = vrot.slane %v694, 4
      %v697 = vrot.slane %v186, 5
      %v698 = vsel %vm663, %v696, %v697
      %v699 = vrot.slane %v187, 5
      %v700 = vrot.slane %v699, 4
      %v701 = vrot.slane %v188, 5
      %v702 = vsel %vm663, %v700, %v701
      %v703 = vrot.slane %v701, 4
      %v704 = vrot.slane %v189, 5
      %v705 = vsel %vm663, %v703, %v704
      %v706 = vrot.slane %v190, 5
      %v707 = vrot.slane %v706, 4
      %v708 = vrot.slane %v191, 5
      %v709 = vsel %vm663, %v707, %v708
      %v710 = vrot.slane %v708, 4
      %v711 = vrot.slane %v192, 5
      %v712 = vsel %vm663, %v710, %v711
      %v713 = vrot.slane %v193, 5
      %v714 = vrot.slane %v713, 4
      %v715 = vrot.slane %v194, 5
      %v716 = vsel %vm663, %v714, %v715
      %v717 = vrot.slane %v715, 4
      %v718 = vrot.slane %v195, 5
      %v719 = vsel %vm663, %v717, %v718
      %v720 = vrot.slane %v196, 5
      %v721 = vrot.slane %v720, 4
      %v722 = vrot.slane %v197, 5
      %v723 = vsel %vm663, %v721, %v722
      %v724 = vrot.slane %v722, 4
      %v725 = vrot.slane %v198, 5
      %v726 = vsel %vm663, %v724, %v725
      %v727 = vrot.slane %v199, 5
      %v728 = vrot.slane %v727, 4
      %v729 = vrot.slane %v200, 5
      %v730 = vsel %vm663, %v728, %v729
      %v731 = vrot.slane %v729, 4
      %v732 = vrot.slane %v201, 5
      %v733 = vsel %vm663, %v731, %v732
      %v734 = vrot.slane %v202, 5
      %v735 = vrot.slane %v734, 4
      %v736 = vrot.slane %v203, 5
      %v737 = vsel %vm663, %v735, %v736
      %v738 = vrot.slane %v736, 4
      %v739 = vrot.slane %v204, 5
      %v740 = vsel %vm663, %v738, %v739
      %v741 = vrot.slane %v205, 5
      %v742 = vrot.slane %v741, 4
      %v743 = vrot.slane %v206, 5
      %v744 = vsel %vm663, %v742, %v743
      %v745 = vrot.slane %v743, 4
      %v746 = vrot.slane %v207, 5
      %v747 = vsel %vm663, %v745, %v746
      %v748 = vrot.slane %v208, 5
      %v749 = vrot.slane %v748, 4
      %v750 = vrot.slane %v209, 5
      %v751 = vsel %vm663, %v749, %v750
      %v752 = vrot.slane %v750, 4
      %v753 = vrot.slane %v210, 5
      %v754 = vsel %vm663, %v752, %v753
      %v755 = vrot.slane %v211, 5
      %v756 = vrot.slane %v755, 4
      %v757 = vrot.slane %v212, 5
      %v758 = vsel %vm663, %v756, %v757
      %v759 = vrot.slane %v757, 4
      %v760 = vrot.slane %v213, 5
      %v761 = vsel %vm663, %v759, %v760
      %v762 = vrot.slane %v214, 5
      %v763 = vrot.slane %v762, 4
      %v764 = vrot.slane %v215, 5
      %v765 = vsel %vm663, %v763, %v764
      %v766 = vrot.slane %v764, 4
      %v767 = vrot.slane %v216, 5
      %v768 = vsel %vm663, %v766, %v767
      %v769 = vrot.slane %v217, 5
      %v770 = vrot.slane %v769, 4
      %v771 = vrot.slane %v218, 5
      %v772 = vsel %vm663, %v770, %v771
      %v773 = vrot.slane %v771, 4
      %v774 = vrot.slane %v219, 5
      %v775 = vsel %vm663, %v773, %v774
      %v777 = vshrl.u32 %v220, 16
      %v779 = vrot.slane %v777, 4
      %v780 = vshll.u32 %v220, 16
      %v782 = vrot.slane %v780, 5
      %v783 = vor.u32 %v779, %v782
      %v784 = vrot.slane %v783, 4
      %v786 = vshll.u32 %v221, 16
      %v788 = vrot.slane %v786, 5
      %v789 = vsel %vm228, %v784, %v788
      %v790 = vshrl.u32 %v221, 16
      %v792 = vrot.slane %v790, 4
      %v793 = vor.u32 %v792, %v788
      %v794 = vrot.slane %v793, 4
      %v796 = vshll.u32 %v222, 16
      %v798 = vrot.slane %v796, 5
      %v799 = vsel %vm228, %v794, %v798
      %v803 = vrot.slane %v220, 5
      %v804 = vrot.slane %v803, 4
      %v805 = vrot.slane %v221, 5
      %v806 = vsel %vm663, %v804, %v805
      %v807 = vrot.slane %v805, 4
      %v808 = vrot.slane %v222, 5
      %v809 = vsel %vm663, %v807, %v808
      %v811 = vshrl.u32 %v223, 16
      %v813 = vrot.slane %v811, 4
      %v814 = vshll.u32 %v223, 16
      %v816 = vrot.slane %v814, 5
      %v817 = vor.u32 %v813, %v816
      %v818 = vrot.slane %v817, 4
      %v820 = vshll.u32 %v224, 16
      %v822 = vrot.slane %v820, 5
      %v823 = vsel %vm228, %v818, %v822
      %v824 = vshrl.u32 %v224, 16
      %v826 = vrot.slane %v824, 4
      %v827 = vor.u32 %v826, %v822
      %v828 = vrot.slane %v827, 4
      %v830 = vshll.u32 %v225, 16
      %v832 = vrot.slane %v830, 5
      %v833 = vsel %vm228, %v828, %v832
      %v837 = vrot.slane %v223, 5
      %v838 = vrot.slane %v837, 4
      %v839 = vrot.slane %v224, 5
      %v840 = vsel %vm663, %v838, %v839
      %v841 = vrot.slane %v839, 4
      %v842 = vrot.slane %v225, 5
      %v843 = vsel %vm663, %v841, %v842
      %v844 = vunpack.c.l.b16 %v172
      %v845 = vunpack.c.l.b16 %v173
      %v846 = vunpack.c.l.b16 %v175
      %v847 = vunpack.c.l.b16 %v176
      %v848 = vunpack.c.l.b16 %v178
      %v849 = vunpack.c.l.b16 %v179
      %v850 = vunpack.c.l.b16 %v181
      %v851 = vunpack.c.l.b16 %v182
      %v852 = vunpack.c.l.b16 %v184
      %v853 = vunpack.c.l.b16 %v185
      %v854 = vunpack.c.l.b16 %v187
      %v855 = vunpack.c.l.b16 %v188
      %v856 = vunpack.c.l.b16 %v190
      %v857 = vunpack.c.l.b16 %v191
      %v858 = vunpack.c.l.b16 %v193
      %v859 = vunpack.c.l.b16 %v194
      %v860 = vunpack.c.l.b16 %v196
      %v861 = vunpack.c.l.b16 %v197
      %v862 = vunpack.c.l.b16 %v199
      %v863 = vunpack.c.l.b16 %v200
      %v864 = vunpack.c.l.b16 %v202
      %v865 = vunpack.c.l.b16 %v203
      %v866 = vunpack.c.l.b16 %v205
      %v867 = vunpack.c.l.b16 %v206
      %v868 = vunpack.c.l.b16 %v208
      %v869 = vunpack.c.l.b16 %v209
      %v870 = vunpack.c.l.b16 %v211
      %v871 = vunpack.c.l.b16 %v212
      %v872 = vunpack.c.l.b16 %v214
      %v873 = vunpack.c.l.b16 %v215
      %v874 = vunpack.c.l.b16 %v217
      %v875 = vunpack.c.l.b16 %v218
      %v876 = vpack.c.b16 %v845, %v844
      %v877 = vpack.c.b16 %v847, %v846
      %v878 = vpack.c.b16 %v849, %v848
      %v879 = vpack.c.b16 %v851, %v850
      %v880 = vpack.c.b16 %v853, %v852
      %v881 = vpack.c.b16 %v855, %v854
      %v882 = vpack.c.b16 %v857, %v856
      %v883 = vpack.c.b16 %v859, %v858
      %v884 = vpack.c.b16 %v861, %v860
      %v885 = vpack.c.b16 %v863, %v862
      %v886 = vpack.c.b16 %v865, %v864
      %v887 = vpack.c.b16 %v867, %v866
      %v888 = vpack.c.b16 %v869, %v868
      %v889 = vpack.c.b16 %v871, %v870
      %v890 = vpack.c.b16 %v873, %v872
      %v891 = vpack.c.b16 %v875, %v874
      %v892 = vunpack.c.l.b16 %v242
      %v893 = vunpack.c.l.b16 %v252
      %v894 = vunpack.c.l.b16 %v266
      %v895 = vunpack.c.l.b16 %v276
      %v896 = vunpack.c.l.b16 %v290
      %v897 = vunpack.c.l.b16 %v300
      %v898 = vunpack.c.l.b16 %v314
      %v899 = vunpack.c.l.b16 %v324
      %v900 = vunpack.c.l.b16 %v338
      %v901 = vunpack.c.l.b16 %v348
      %v902 = vunpack.c.l.b16 %v362
      %v903 = vunpack.c.l.b16 %v372
      %v904 = vunpack.c.l.b16 %v386
      %v905 = vunpack.c.l.b16 %v396
      %v906 = vunpack.c.l.b16 %v410
      %v907 = vunpack.c.l.b16 %v420
      %v908 = vunpack.c.l.b16 %v434
      %v909 = vunpack.c.l.b16 %v444
      %v910 = vunpack.c.l.b16 %v458
      %v911 = vunpack.c.l.b16 %v468
      %v912 = vunpack.c.l.b16 %v482
      %v913 = vunpack.c.l.b16 %v492
      %v914 = vunpack.c.l.b16 %v506
      %v915 = vunpack.c.l.b16 %v516
      %v916 = vunpack.c.l.b16 %v530
      %v917 = vunpack.c.l.b16 %v540
      %v918 = vunpack.c.l.b16 %v554
      %v919 = vunpack.c.l.b16 %v564
      %v920 = vunpack.c.l.b16 %v578
      %v921 = vunpack.c.l.b16 %v588
      %v922 = vunpack.c.l.b16 %v602
      %v923 = vunpack.c.l.b16 %v612
      %v924 = vpack.c.b16 %v893, %v892
      %v925 = vpack.c.b16 %v895, %v894
      %v926 = vpack.c.b16 %v897, %v896
      %v927 = vpack.c.b16 %v899, %v898
      %v928 = vpack.c.b16 %v901, %v900
      %v929 = vpack.c.b16 %v903, %v902
      %v930 = vpack.c.b16 %v905, %v904
      %v931 = vpack.c.b16 %v907, %v906
      %v932 = vpack.c.b16 %v909, %v908
      %v933 = vpack.c.b16 %v911, %v910
      %v934 = vpack.c.b16 %v913, %v912
      %v935 = vpack.c.b16 %v915, %v914
      %v936 = vpack.c.b16 %v917, %v916
      %v937 = vpack.c.b16 %v919, %v918
      %v938 = vpack.c.b16 %v921, %v920
      %v939 = vpack.c.b16 %v923, %v922
      %940 = vrot.lane.b32.xlu0 %v924, 32
      %v941 = vpop.permute.xlu0 %940
      %942 = vrot.lane.b32.xlu0 %v925, 32
      %v943 = vpop.permute.xlu0 %942
      %944 = vrot.lane.b32.xlu0 %v926, 32
      %v945 = vpop.permute.xlu0 %944
      %946 = vrot.lane.b32.xlu0 %v927, 32
      %v947 = vpop.permute.xlu0 %946
      %948 = vrot.lane.b32.xlu0 %v928, 32
      %v949 = vpop.permute.xlu0 %948
      %950 = vrot.lane.b32.xlu0 %v929, 32
      %v951 = vpop.permute.xlu0 %950
      %952 = vrot.lane.b32.xlu0 %v930, 32
      %v953 = vpop.permute.xlu0 %952
      %954 = vrot.lane.b32.xlu0 %v931, 32
      %v955 = vpop.permute.xlu0 %954
      %956 = vrot.lane.b32.xlu0 %v932, 32
      %v957 = vpop.permute.xlu0 %956
      %958 = vrot.lane.b32.xlu0 %v933, 32
      %v959 = vpop.permute.xlu0 %958
      %960 = vrot.lane.b32.xlu0 %v934, 32
      %v961 = vpop.permute.xlu0 %960
      %962 = vrot.lane.b32.xlu0 %v935, 32
      %v963 = vpop.permute.xlu0 %962
      %964 = vrot.lane.b32.xlu0 %v936, 32
      %v965 = vpop.permute.xlu0 %964
      %966 = vrot.lane.b32.xlu0 %v937, 32
      %v967 = vpop.permute.xlu0 %966
      %968 = vrot.lane.b32.xlu0 %v938, 32
      %v969 = vpop.permute.xlu0 %968
      %970 = vrot.lane.b32.xlu0 %v939, 32
      %v971 = vpop.permute.xlu0 %970
      %v972 = vunpack.c.l.b16 %v667
      %v973 = vunpack.c.l.b16 %v670
      %v974 = vunpack.c.l.b16 %v674
      %v975 = vunpack.c.l.b16 %v677
      %v976 = vunpack.c.l.b16 %v681
      %v977 = vunpack.c.l.b16 %v684
      %v978 = vunpack.c.l.b16 %v688
      %v979 = vunpack.c.l.b16 %v691
      %v980 = vunpack.c.l.b16 %v695
      %v981 = vunpack.c.l.b16 %v698
      %v982 = vunpack.c.l.b16 %v702
      %v983 = vunpack.c.l.b16 %v705
      %v984 = vunpack.c.l.b16 %v709
      %v985 = vunpack.c.l.b16 %v712
      %v986 = vunpack.c.l.b16 %v716
      %v987 = vunpack.c.l.b16 %v719
      %v988 = vunpack.c.l.b16 %v723
      %v989 = vunpack.c.l.b16 %v726
      %v990 = vunpack.c.l.b16 %v730
      %v991 = vunpack.c.l.b16 %v733
      %v992 = vunpack.c.l.b16 %v737
      %v993 = vunpack.c.l.b16 %v740
      %v994 = vunpack.c.l.b16 %v744
      %v995 = vunpack.c.l.b16 %v747
      %v996 = vunpack.c.l.b16 %v751
      %v997 = vunpack.c.l.b16 %v754
      %v998 = vunpack.c.l.b16 %v758
      %v999 = vunpack.c.l.b16 %v761
      %v1000 = vunpack.c.l.b16 %v765
      %v1001 = vunpack.c.l.b16 %v768
      %v1002 = vunpack.c.l.b16 %v772
      %v1003 = vunpack.c.l.b16 %v775
      %v1004 = vpack.c.b16 %v973, %v972
      %v1005 = vpack.c.b16 %v975, %v974
      %v1006 = vpack.c.b16 %v977, %v976
      %v1007 = vpack.c.b16 %v979, %v978
      %v1008 = vpack.c.b16 %v981, %v980
      %v1009 = vpack.c.b16 %v983, %v982
      %v1010 = vpack.c.b16 %v985, %v984
      %v1011 = vpack.c.b16 %v987, %v986
      %v1012 = vpack.c.b16 %v989, %v988
      %v1013 = vpack.c.b16 %v991, %v990
      %v1014 = vpack.c.b16 %v993, %v992
      %v1015 = vpack.c.b16 %v995, %v994
      %v1016 = vpack.c.b16 %v997, %v996
      %v1017 = vpack.c.b16 %v999, %v998
      %v1018 = vpack.c.b16 %v1001, %v1000
      %v1019 = vpack.c.b16 %v1003, %v1002
      %1020 = vrot.lane.b32.xlu0 %v1004, 64
      %v1021 = vpop.permute.xlu0 %1020
      %1022 = vrot.lane.b32.xlu0 %v1005, 64
      %v1023 = vpop.permute.xlu0 %1022
      %1024 = vrot.lane.b32.xlu0 %v1006, 64
      %v1025 = vpop.permute.xlu0 %1024
      %1026 = vrot.lane.b32.xlu0 %v1007, 64
      %v1027 = vpop.permute.xlu0 %1026
      %1028 = vrot.lane.b32.xlu0 %v1008, 64
      %v1029 = vpop.permute.xlu0 %1028
      %1030 = vrot.lane.b32.xlu0 %v1009, 64
      %v1031 = vpop.permute.xlu0 %1030
      %1032 = vrot.lane.b32.xlu0 %v1010, 64
      %v1033 = vpop.permute.xlu0 %1032
      %1034 = vrot.lane.b32.xlu0 %v1011, 64
      %v1035 = vpop.permute.xlu0 %1034
      %1036 = vrot.lane.b32.xlu0 %v1012, 64
      %v1037 = vpop.permute.xlu0 %1036
      %1038 = vrot.lane.b32.xlu0 %v1013, 64
      %v1039 = vpop.permute.xlu0 %1038
      %1040 = vrot.lane.b32.xlu0 %v1014, 64
      %v1041 = vpop.permute.xlu0 %1040
      %1042 = vrot.lane.b32.xlu0 %v1015, 64
      %v1043 = vpop.permute.xlu0 %1042
      %1044 = vrot.lane.b32.xlu0 %v1016, 64
      %v1045 = vpop.permute.xlu0 %1044
      %1046 = vrot.lane.b32.xlu0 %v1017, 64
      %v1047 = vpop.permute.xlu0 %1046
      %1048 = vrot.lane.b32.xlu0 %v1018, 64
      %v1049 = vpop.permute.xlu0 %1048
      %1050 = vrot.lane.b32.xlu0 %v1019, 64
      %v1051 = vpop.permute.xlu0 %1050
      %v1052 = vunpack.c.l.b16 %v220
      %v1053 = vunpack.c.l.b16 %v221
      %v1054 = vpack.c.b16 %v1053, %v1052
      %1055 = vrot.lane.b32.xlu0 %v877, 96
      %v1056 = vpop.permute.xlu0 %1055
      %1057 = vrot.lane.b32.xlu0 %v878, 96
      %v1058 = vpop.permute.xlu0 %1057
      %1059 = vrot.lane.b32.xlu0 %v879, 96
      %v1060 = vpop.permute.xlu0 %1059
      %1061 = vrot.lane.b32.xlu0 %v880, 96
      %v1062 = vpop.permute.xlu0 %1061
      %1063 = vrot.lane.b32.xlu0 %v881, 96
      %v1064 = vpop.permute.xlu0 %1063
      %1065 = vrot.lane.b32.xlu0 %v882, 96
      %v1066 = vpop.permute.xlu0 %1065
      %1067 = vrot.lane.b32.xlu0 %v883, 96
      %v1068 = vpop.permute.xlu0 %1067
      %1069 = vrot.lane.b32.xlu0 %v884, 96
      %v1070 = vpop.permute.xlu0 %1069
      %1071 = vrot.lane.b32.xlu0 %v885, 96
      %v1072 = vpop.permute.xlu0 %1071
      %1073 = vrot.lane.b32.xlu0 %v886, 96
      %v1074 = vpop.permute.xlu0 %1073
      %1075 = vrot.lane.b32.xlu0 %v887, 96
      %v1076 = vpop.permute.xlu0 %1075
      %1077 = vrot.lane.b32.xlu0 %v888, 96
      %v1078 = vpop.permute.xlu0 %1077
      %1079 = vrot.lane.b32.xlu0 %v889, 96
      %v1080 = vpop.permute.xlu0 %1079
      %1081 = vrot.lane.b32.xlu0 %v890, 96
      %v1082 = vpop.permute.xlu0 %1081
      %1083 = vrot.lane.b32.xlu0 %v891, 96
      %v1084 = vpop.permute.xlu0 %1083
      %1085 = vrot.lane.b32.xlu0 %v1054, 96
      %v1086 = vpop.permute.xlu0 %1085
      %v1087 = vunpack.c.l.b16 %v789
      %v1088 = vunpack.c.l.b16 %v799
      %v1089 = vpack.c.b16 %v1088, %v1087
      %v1090 = vunpack.c.l.b16 %v806
      %v1091 = vunpack.c.l.b16 %v809
      %v1092 = vpack.c.b16 %v1091, %v1090
      %1093 = vrot.lane.b32.xlu0 %v1005, 32
      %v1094 = vpop.permute.xlu0 %1093
      %1095 = vrot.lane.b32.xlu0 %v1006, 32
      %v1096 = vpop.permute.xlu0 %1095
      %1097 = vrot.lane.b32.xlu0 %v1007, 32
      %v1098 = vpop.permute.xlu0 %1097
      %1099 = vrot.lane.b32.xlu0 %v1008, 32
      %v1100 = vpop.permute.xlu0 %1099
      %1101 = vrot.lane.b32.xlu0 %v1009, 32
      %v1102 = vpop.permute.xlu0 %1101
      %1103 = vrot.lane.b32.xlu0 %v1010, 32
      %v1104 = vpop.permute.xlu0 %1103
      %1105 = vrot.lane.b32.xlu0 %v1011, 32
      %v1106 = vpop.permute.xlu0 %1105
      %1107 = vrot.lane.b32.xlu0 %v1012, 32
      %v1108 = vpop.permute.xlu0 %1107
      %1109 = vrot.lane.b32.xlu0 %v1013, 32
      %v1110 = vpop.permute.xlu0 %1109
      %1111 = vrot.lane.b32.xlu0 %v1014, 32
      %v1112 = vpop.permute.xlu0 %1111
      %1113 = vrot.lane.b32.xlu0 %v1015, 32
      %v1114 = vpop.permute.xlu0 %1113
      %1115 = vrot.lane.b32.xlu0 %v1016, 32
      %v1116 = vpop.permute.xlu0 %1115
      %1117 = vrot.lane.b32.xlu0 %v1017, 32
      %v1118 = vpop.permute.xlu0 %1117
      %1119 = vrot.lane.b32.xlu0 %v1018, 32
      %v1120 = vpop.permute.xlu0 %1119
      %1121 = vrot.lane.b32.xlu0 %v1019, 32
      %v1122 = vpop.permute.xlu0 %1121
      %1123 = vrot.lane.b32.xlu0 %v1092, 32
      %v1124 = vpop.permute.xlu0 %1123
      %v1125 = vunpack.c.l.b16 %v223
      %v1126 = vunpack.c.l.b16 %v224
      %v1127 = vpack.c.b16 %v1126, %v1125
      %1128 = vrot.lane.b32.xlu0 %v878, 64
      %v1129 = vpop.permute.xlu0 %1128
      %1130 = vrot.lane.b32.xlu0 %v879, 64
      %v1131 = vpop.permute.xlu0 %1130
      %1132 = vrot.lane.b32.xlu0 %v880, 64
      %v1133 = vpop.permute.xlu0 %1132
      %1134 = vrot.lane.b32.xlu0 %v881, 64
      %v1135 = vpop.permute.xlu0 %1134
      %1136 = vrot.lane.b32.xlu0 %v882, 64
      %v1137 = vpop.permute.xlu0 %1136
      %1138 = vrot.lane.b32.xlu0 %v883, 64
      %v1139 = vpop.permute.xlu0 %1138
      %1140 = vrot.lane.b32.xlu0 %v884, 64
      %v1141 = vpop.permute.xlu0 %1140
      %1142 = vrot.lane.b32.xlu0 %v885, 64
      %v1143 = vpop.permute.xlu0 %1142
      %1144 = vrot.lane.b32.xlu0 %v886, 64
      %v1145 = vpop.permute.xlu0 %1144
      %1146 = vrot.lane.b32.xlu0 %v887, 64
      %v1147 = vpop.permute.xlu0 %1146
      %1148 = vrot.lane.b32.xlu0 %v888, 64
      %v1149 = vpop.permute.xlu0 %1148
      %1150 = vrot.lane.b32.xlu0 %v889, 64
      %v1151 = vpop.permute.xlu0 %1150
      %1152 = vrot.lane.b32.xlu0 %v890, 64
      %v1153 = vpop.permute.xlu0 %1152
      %1154 = vrot.lane.b32.xlu0 %v891, 64
      %v1155 = vpop.permute.xlu0 %1154
      %1156 = vrot.lane.b32.xlu0 %v1054, 64
      %v1157 = vpop.permute.xlu0 %1156
      %1158 = vrot.lane.b32.xlu0 %v1127, 64
      %v1159 = vpop.permute.xlu0 %1158
      %v1160 = vunpack.c.l.b16 %v823
      %v1161 = vunpack.c.l.b16 %v833
      %v1162 = vpack.c.b16 %v1161, %v1160
      %1163 = vrot.lane.b32.xlu0 %v926, 96
      %v1164 = vpop.permute.xlu0 %1163
      %1165 = vrot.lane.b32.xlu0 %v927, 96
      %v1166 = vpop.permute.xlu0 %1165
      %1167 = vrot.lane.b32.xlu0 %v928, 96
      %v1168 = vpop.permute.xlu0 %1167
      %1169 = vrot.lane.b32.xlu0 %v929, 96
      %v1170 = vpop.permute.xlu0 %1169
      %1171 = vrot.lane.b32.xlu0 %v930, 96
      %v1172 = vpop.permute.xlu0 %1171
      %1173 = vrot.lane.b32.xlu0 %v931, 96
      %v1174 = vpop.permute.xlu0 %1173
      %1175 = vrot.lane.b32.xlu0 %v932, 96
      %v1176 = vpop.permute.xlu0 %1175
      %1177 = vrot.lane.b32.xlu0 %v933, 96
      %v1178 = vpop.permute.xlu0 %1177
      %1179 = vrot.lane.b32.xlu0 %v934, 96
      %v1180 = vpop.permute.xlu0 %1179
      %1181 = vrot.lane.b32.xlu0 %v935, 96
      %v1182 = vpop.permute.xlu0 %1181
      %1183 = vrot.lane.b32.xlu0 %v936, 96
      %v1184 = vpop.permute.xlu0 %1183
      %1185 = vrot.lane.b32.xlu0 %v937, 96
      %v1186 = vpop.permute.xlu0 %1185
      %1187 = vrot.lane.b32.xlu0 %v938, 96
      %v1188 = vpop.permute.xlu0 %1187
      %1189 = vrot.lane.b32.xlu0 %v939, 96
      %v1190 = vpop.permute.xlu0 %1189
      %1191 = vrot.lane.b32.xlu0 %v1089, 96
      %v1192 = vpop.permute.xlu0 %1191
      %1193 = vrot.lane.b32.xlu0 %v1162, 96
      %v1194 = vpop.permute.xlu0 %1193
      %v1195 = vunpack.c.l.b16 %v840
      %v1196 = vunpack.c.l.b16 %v843
      %v1197 = vpack.c.b16 %v1196, %v1195
      %vm1198 = vcmask 261120
      %v1201 = vsel %vm1198, %v876, %v941
      %v1204 = vsel %vm1198, %v877, %v943
      %v1207 = vsel %vm1198, %v878, %v945
      %v1210 = vsel %vm1198, %v879, %v947
      %v1213 = vsel %vm1198, %v880, %v949
      %v1216 = vsel %vm1198, %v881, %v951
      %v1219 = vsel %vm1198, %v882, %v953
      %v1222 = vsel %vm1198, %v883, %v955
      %v1225 = vsel %vm1198, %v884, %v957
      %v1228 = vsel %vm1198, %v885, %v959
      %v1231 = vsel %vm1198, %v886, %v961
      %v1234 = vsel %vm1198, %v887, %v963
      %v1237 = vsel %vm1198, %v888, %v965
      %v1240 = vsel %vm1198, %v889, %v967
      %v1243 = vsel %vm1198, %v890, %v969
      %v1246 = vsel %vm1198, %v891, %v971
      %vm1247 = vcmask 523264
      %v1249 = vsel %vm1247, %v1201, %v1021
      %v1251 = vsel %vm1247, %v1204, %v1023
      %v1253 = vsel %vm1247, %v1207, %v1025
      %v1255 = vsel %vm1247, %v1210, %v1027
      %v1257 = vsel %vm1247, %v1213, %v1029
      %v1259 = vsel %vm1247, %v1216, %v1031
      %v1261 = vsel %vm1247, %v1219, %v1033
      %v1263 = vsel %vm1247, %v1222, %v1035
      %v1265 = vsel %vm1247, %v1225, %v1037
      %v1267 = vsel %vm1247, %v1228, %v1039
      %v1269 = vsel %vm1247, %v1231, %v1041
      %v1271 = vsel %vm1247, %v1234, %v1043
      %v1273 = vsel %vm1247, %v1237, %v1045
      %v1275 = vsel %vm1247, %v1240, %v1047
      %v1277 = vsel %vm1247, %v1243, %v1049
      %v1279 = vsel %vm1247, %v1246, %v1051
      %vm1280 = vcmask 785408
      %v1282 = vsel %vm1280, %v1249, %v1056
      %v1285 = vsel %vm1280, %v1251, %v1058
      %v1288 = vsel %vm1280, %v1253, %v1060
      %v1291 = vsel %vm1280, %v1255, %v1062
      %v1294 = vsel %vm1280, %v1257, %v1064
      %v1297 = vsel %vm1280, %v1259, %v1066
      %v1300 = vsel %vm1280, %v1261, %v1068
      %v1303 = vsel %vm1280, %v1263, %v1070
      %v1306 = vsel %vm1280, %v1265, %v1072
      %v1309 = vsel %vm1280, %v1267, %v1074
      %v1312 = vsel %vm1280, %v1269, %v1076
      %v1315 = vsel %vm1280, %v1271, %v1078
      %v1318 = vsel %vm1280, %v1273, %v1080
      %v1321 = vsel %vm1280, %v1275, %v1082
      %v1324 = vsel %vm1280, %v1277, %v1084
      %v1327 = vsel %vm1280, %v1279, %v1086
      %v1331 = vsel %vm1198, %v925, %v1094
      %v1334 = vsel %vm1198, %v926, %v1096
      %v1337 = vsel %vm1198, %v927, %v1098
      %v1340 = vsel %vm1198, %v928, %v1100
      %v1343 = vsel %vm1198, %v929, %v1102
      %v1346 = vsel %vm1198, %v930, %v1104
      %v1349 = vsel %vm1198, %v931, %v1106
      %v1352 = vsel %vm1198, %v932, %v1108
      %v1355 = vsel %vm1198, %v933, %v1110
      %v1358 = vsel %vm1198, %v934, %v1112
      %v1361 = vsel %vm1198, %v935, %v1114
      %v1364 = vsel %vm1198, %v936, %v1116
      %v1367 = vsel %vm1198, %v937, %v1118
      %v1370 = vsel %vm1198, %v938, %v1120
      %v1373 = vsel %vm1198, %v939, %v1122
      %v1376 = vsel %vm1198, %v1089, %v1124
      %v1378 = vsel %vm1247, %v1331, %v1129
      %v1380 = vsel %vm1247, %v1334, %v1131
      %v1382 = vsel %vm1247, %v1337, %v1133
      %v1384 = vsel %vm1247, %v1340, %v1135
      %v1386 = vsel %vm1247, %v1343, %v1137
      %v1388 = vsel %vm1247, %v1346, %v1139
      %v1390 = vsel %vm1247, %v1349, %v1141
      %v1392 = vsel %vm1247, %v1352, %v1143
      %v1394 = vsel %vm1247, %v1355, %v1145
      %v1396 = vsel %vm1247, %v1358, %v1147
      %v1398 = vsel %vm1247, %v1361, %v1149
      %v1400 = vsel %vm1247, %v1364, %v1151
      %v1402 = vsel %vm1247, %v1367, %v1153
      %v1404 = vsel %vm1247, %v1370, %v1155
      %v1406 = vsel %vm1247, %v1373, %v1157
      %v1408 = vsel %vm1247, %v1376, %v1159
      %v1410 = vsel %vm1280, %v1378, %v1164
      %v1413 = vsel %vm1280, %v1380, %v1166
      %v1416 = vsel %vm1280, %v1382, %v1168
      %v1419 = vsel %vm1280, %v1384, %v1170
      %v1422 = vsel %vm1280, %v1386, %v1172
      %v1425 = vsel %vm1280, %v1388, %v1174
      %v1428 = vsel %vm1280, %v1390, %v1176
      %v1431 = vsel %vm1280, %v1392, %v1178
      %v1434 = vsel %vm1280, %v1394, %v1180
      %v1437 = vsel %vm1280, %v1396, %v1182
      %v1440 = vsel %vm1280, %v1398, %v1184
      %v1443 = vsel %vm1280, %v1400, %v1186
      %v1446 = vsel %vm1280, %v1402, %v1188
      %v1449 = vsel %vm1280, %v1404, %v1190
      %v1452 = vsel %vm1280, %v1406, %v1192
      %v1455 = vsel %vm1280, %v1408, %v1194
      %v1457 = vld [vmem:[%s1] sm:$0xf]
      %v1458 = vld [vmem:[%s1 + $0x4] sm:$0xf]
      %v1459 = vld [vmem:[%s1 + $0x8] sm:$0xf]
      %v1460 = vld [vmem:[%s1 + $0xc] sm:$0xf]
      %v1461 = vld [vmem:[%s1 + $0x10] sm:$0xf]
      %v1462 = vld [vmem:[%s1 + $0x14] sm:$0xf]
      %v1463 = vld [vmem:[%s1 + $0x18] sm:$0xf]
      %v1464 = vld [vmem:[%s1 + $0x1c] sm:$0xf]
      %v1465 = vld [vmem:[%s1 + $0x20] sm:$0xf]
      %v1466 = vld [vmem:[%s1 + $0x24] sm:$0xf]
      %v1467 = vld [vmem:[%s1 + $0x28] sm:$0xf]
      %v1468 = vld [vmem:[%s1 + $0x2c] sm:$0xf]
      %v1469 = vld [vmem:[%s1 + $0x30] sm:$0xf]
      %v1470 = vld [vmem:[%s1 + $0x34] sm:$0xf]
      %v1471 = vld [vmem:[%s1 + $0x38] sm:$0xf]
      %v1472 = vld [vmem:[%s1 + $0x3c] sm:$0xf]
      %v1473 = vld [vmem:[%s1 + $0x40] sm:$0xf]
      %v1474 = vld [vmem:[%s1 + $0x44] sm:$0xf]
      %v1475 = vld [vmem:[%s1 + $0x48] sm:$0xf]
      %v1476 = vld [vmem:[%s1 + $0x4c] sm:$0xf]
      %v1477 = vld [vmem:[%s1 + $0x50] sm:$0xf]
      %v1478 = vld [vmem:[%s1 + $0x54] sm:$0xf]
      %v1479 = vld [vmem:[%s1 + $0x58] sm:$0xf]
      %v1480 = vld [vmem:[%s1 + $0x5c] sm:$0xf]
      %v1481 = vld [vmem:[%s1 + $0x60] sm:$0xf]
      %v1482 = vld [vmem:[%s1 + $0x64] sm:$0xf]
      %v1483 = vld [vmem:[%s1 + $0x68] sm:$0xf]
      %v1484 = vld [vmem:[%s1 + $0x6c] sm:$0xf]
      %v1485 = vld [vmem:[%s1 + $0x70] sm:$0xf]
      %v1486 = vld [vmem:[%s1 + $0x74] sm:$0xf]
      %v1487 = vld [vmem:[%s1 + $0x78] sm:$0xf]
      %v1488 = vld [vmem:[%s1 + $0x7c] sm:$0xf]
      %v1489 = vld [vmem:[%s1 + $0x80] sm:$0xf]
      %v1490 = vld [vmem:[%s1 + $0x84] sm:$0xf]
      %v1491 = vld [vmem:[%s1 + $0x88] sm:$0xf]
      %v1492 = vld [vmem:[%s1 + $0x8c] sm:$0xf]
      %v1493 = vld [vmem:[%s2] sm:$0x1]
      %v1495 = vlaneseq
      %v1496 = vshrl.u32 %v1495, 7
      %v1497 = vsub.s32 0, %v1496
      %v1498 = vrot.slane %v1493, %v1497
      %v1536 = vunpack.c.l.b16 %v1457
      %v1537 = vunpack.c.l.b16 %v1458
      %v1538 = vunpack.c.l.b16 %v1459
      %v1539 = vunpack.c.l.b16 %v1460
      %v1540 = vunpack.c.l.b16 %v1461
      %v1541 = vunpack.c.l.b16 %v1462
      %v1542 = vunpack.c.l.b16 %v1463
      %v1543 = vunpack.c.l.b16 %v1464
      %v1544 = vunpack.c.l.b16 %v1465
      %v1545 = vunpack.c.l.b16 %v1466
      %v1546 = vunpack.c.l.b16 %v1467
      %v1547 = vunpack.c.l.b16 %v1468
      %v1548 = vunpack.c.l.b16 %v1469
      %v1549 = vunpack.c.l.b16 %v1470
      %v1550 = vunpack.c.l.b16 %v1471
      %v1551 = vunpack.c.l.b16 %v1472
      %v1552 = vunpack.c.l.b16 %v1473
      %v1553 = vunpack.c.l.b16 %v1474
      %v1554 = vunpack.c.l.b16 %v1475
      %v1555 = vunpack.c.l.b16 %v1476
      %v1556 = vunpack.c.l.b16 %v1477
      %v1557 = vunpack.c.l.b16 %v1478
      %v1558 = vunpack.c.l.b16 %v1479
      %v1559 = vunpack.c.l.b16 %v1480
      %v1560 = vunpack.c.l.b16 %v1481
      %v1561 = vunpack.c.l.b16 %v1482
      %v1562 = vunpack.c.l.b16 %v1483
      %v1563 = vunpack.c.l.b16 %v1484
      %v1564 = vunpack.c.l.b16 %v1485
      %v1565 = vunpack.c.l.b16 %v1486
      %v1566 = vunpack.c.l.b16 %v1487
      %v1567 = vunpack.c.l.b16 %v1488
      %v1568 = vunpack.c.l.b16 %v1489
      %v1569 = vunpack.c.l.b16 %v1490
      %v1570 = vunpack.c.l.b16 %v1491
      %v1571 = vunpack.c.l.b16 %v1492
      %v1572 = vpack.c.b16 %v1537, %v1536
      %v1573 = vpack.c.b16 %v1539, %v1538
      %v1574 = vpack.c.b16 %v1541, %v1540
      %v1575 = vpack.c.b16 %v1543, %v1542
      %v1576 = vpack.c.b16 %v1545, %v1544
      %v1577 = vpack.c.b16 %v1547, %v1546
      %v1578 = vpack.c.b16 %v1549, %v1548
      %v1579 = vpack.c.b16 %v1551, %v1550
      %v1580 = vpack.c.b16 %v1553, %v1552
      %v1581 = vpack.c.b16 %v1555, %v1554
      %v1582 = vpack.c.b16 %v1557, %v1556
      %v1583 = vpack.c.b16 %v1559, %v1558
      %v1584 = vpack.c.b16 %v1561, %v1560
      %v1585 = vpack.c.b16 %v1563, %v1562
      %v1586 = vpack.c.b16 %v1565, %v1564
      %v1587 = vpack.c.b16 %v1567, %v1566
      %v1588 = vpack.c.b16 %v1569, %v1568
      %v1589 = vpack.c.b16 %v1571, %v1570
      %v1609 = vsel %vm1198, %v1006, 0
      %v1612 = vsel %vm1198, %v1007, 0
      %v1615 = vsel %vm1198, %v1008, 0
      %v1618 = vsel %vm1198, %v1009, 0
      %v1621 = vsel %vm1198, %v1010, 0
      %v1624 = vsel %vm1198, %v1011, 0
      %v1627 = vsel %vm1198, %v1012, 0
      %v1630 = vsel %vm1198, %v1013, 0
      %v1633 = vsel %vm1198, %v1014, 0
      %v1636 = vsel %vm1198, %v1015, 0
      %v1639 = vsel %vm1198, %v1016, 0
      %v1642 = vsel %vm1198, %v1017, 0
      %v1645 = vsel %vm1198, %v1018, 0
      %v1648 = vsel %vm1198, %v1019, 0
      %v1651 = vsel %vm1198, %v1092, 0
      %v1654 = vsel %vm1198, %v1197, 0
      %1656 = vmatprep.subr.bf16.mxu0 0
      %1657 = vmatpush1.bf16.msra.mxu0 %v1572
      %1658 = vmatprep.subr.bf16.mxu0 0
      %1659 = vmatpush1.bf16.msra.mxu0 %v1573
      %1660 = vmatprep.subr.bf16.mxu0 0
      %1661 = vmatpush1.bf16.msra.mxu0 %v1574
      %1662 = vmatprep.subr.bf16.mxu0 0
      %1663 = vmatpush1.bf16.msra.mxu0 %v1575
      %1664 = vmatprep.subr.bf16.mxu0 0
      %1665 = vmatpush1.bf16.msra.mxu0 %v1576
      %1666 = vmatprep.subr.bf16.mxu0 0
      %1667 = vmatpush1.bf16.msra.mxu0 %v1577
      %1668 = vmatprep.subr.bf16.mxu0 0
      %1669 = vmatpush1.bf16.msra.mxu0 %v1578
      %1670 = vmatprep.subr.bf16.mxu0 0
      %1671 = vmatpush1.bf16.msra.mxu0 %v1579
      %1672 = vmatprep.subr.bf16.mxu0 0
      %1673 = vmatpush1.bf16.msra.mxu0 %v1580
      %1674 = vmatprep.subr.bf16.mxu0 0
      %1675 = vmatpush1.bf16.msra.mxu0 %v1581
      %1676 = vmatprep.subr.bf16.mxu0 0
      %1677 = vmatpush1.bf16.msra.mxu0 %v1582
      %1678 = vmatprep.subr.bf16.mxu0 0
      %1679 = vmatpush1.bf16.msra.mxu0 %v1583
      %1680 = vmatprep.subr.bf16.mxu0 0
      %1681 = vmatpush1.bf16.msra.mxu0 %v1584
      %1682 = vmatprep.subr.bf16.mxu0 0
      %1683 = vmatpush1.bf16.msra.mxu0 %v1585
      %1684 = vmatprep.subr.bf16.mxu0 0
      %1685 = vmatpush1.bf16.msra.mxu0 %v1586
      %1686 = vmatprep.subr.bf16.mxu0 0
      %1687 = vmatpush1.bf16.msra.mxu0 %v1587
      %1688 = vmatprep.mubr.bf16.mxu0 %v1410
      %1689 = vmatmul.mubr.bf16.gmra.mrb[0].mxu0 %v1282
      %v1690 = vpop.f32.mrb[0].mxu0
      %v1691 = vadd.f32 %v1498, %v1690
      %v1692 = vpop.f32.mrb[0].mxu0
      %v1693 = vpop.f32.mrb[0].mxu0
      %v1694 = vadd.f32 %v1498, %v1693
      %v1695 = vpop.f32.mrb[0].mxu0
      %1696 = vmatprep.mubr.bf16.mxu0 %v1413
      %1697 = vmatmul.mubr.bf16.gmra.mrb[0].mxu0 %v1285
      %v1698 = vpop.f32.mrb[0].mxu0
      %v1699 = vadd.f32 %v1498, %v1698
      %v1700 = vpop.f32.mrb[0].mxu0
      %v1701 = vpop.f32.mrb[0].mxu0
      %v1702 = vadd.f32 %v1498, %v1701
      %v1703 = vpop.f32.mrb[0].mxu0
      %1704 = vmatprep.mubr.bf16.mxu0 %v1416
      %1705 = vmatmul.mubr.bf16.gmra.mrb[0].mxu0 %v1288
      %v1706 = vpop.f32.mrb[0].mxu0
      %v1707 = vadd.f32 %v1498, %v1706
      %v1708 = vpop.f32.mrb[0].mxu0
      %v1709 = vpop.f32.mrb[0].mxu0
      %v1710 = vadd.f32 %v1498, %v1709
      %v1711 = vpop.f32.mrb[0].mxu0
      %1712 = vmatprep.mubr.bf16.mxu0 %v1419
      %1713 = vmatmul.mubr.bf16.gmra.mrb[0].mxu0 %v1291
      %v1714 = vpop.f32.mrb[0].mxu0
      %v1715 = vadd.f32 %v1498, %v1714
      %v1716 = vpop.f32.mrb[0].mxu0
      %v1717 = vpop.f32.mrb[0].mxu0
      %v1718 = vadd.f32 %v1498, %v1717
      %v1719 = vpop.f32.mrb[0].mxu0
      %1720 = vmatprep.mubr.bf16.mxu0 %v1422
      %1721 = vmatmul.mubr.bf16.gmra.mrb[0].mxu0 %v1294
      %v1722 = vpop.f32.mrb[0].mxu0
      %v1723 = vadd.f32 %v1498, %v1722
      %v1724 = vpop.f32.mrb[0].mxu0
      %v1725 = vpop.f32.mrb[0].mxu0
      %v1726 = vadd.f32 %v1498, %v1725
      %v1727 = vpop.f32.mrb[0].mxu0
      %1728 = vmatprep.mubr.bf16.mxu0 %v1425
      %1729 = vmatmul.mubr.bf16.gmra.mrb[0].mxu0 %v1297
      %v1730 = vpop.f32.mrb[0].mxu0
      %v1731 = vadd.f32 %v1498, %v1730
      %v1732 = vpop.f32.mrb[0].mxu0
      %v1733 = vpop.f32.mrb[0].mxu0
      %v1734 = vadd.f32 %v1498, %v1733
      %v1735 = vpop.f32.mrb[0].mxu0
      %1736 = vmatprep.mubr.bf16.mxu0 %v1428
      %1737 = vmatmul.mubr.bf16.gmra.mrb[0].mxu0 %v1300
      %v1738 = vpop.f32.mrb[0].mxu0
      %v1739 = vadd.f32 %v1498, %v1738
      %v1740 = vpop.f32.mrb[0].mxu0
      %v1741 = vpop.f32.mrb[0].mxu0
      %v1742 = vadd.f32 %v1498, %v1741
      %v1743 = vpop.f32.mrb[0].mxu0
      %1744 = vmatprep.mubr.bf16.mxu0 %v1431
      %1745 = vmatmul.mubr.bf16.gmra.mrb[0].mxu0 %v1303
      %v1746 = vpop.f32.mrb[0].mxu0
      %v1747 = vadd.f32 %v1498, %v1746
      %v1748 = vpop.f32.mrb[0].mxu0
      %v1749 = vpop.f32.mrb[0].mxu0
      %v1750 = vadd.f32 %v1498, %v1749
      %v1751 = vpop.f32.mrb[0].mxu0
      %1752 = vmatprep.mubr.bf16.mxu0 %v1434
      %1753 = vmatmul.mubr.bf16.gmra.mrb[0].mxu0 %v1306
      %v1754 = vpop.f32.mrb[0].mxu0
      %v1755 = vadd.f32 %v1498, %v1754
      %v1756 = vpop.f32.mrb[0].mxu0
      %v1757 = vpop.f32.mrb[0].mxu0
      %v1758 = vadd.f32 %v1498, %v1757
      %v1759 = vpop.f32.mrb[0].mxu0
      %1760 = vmatprep.mubr.bf16.mxu0 %v1437
      %1761 = vmatmul.mubr.bf16.gmra.mrb[0].mxu0 %v1309
      %v1762 = vpop.f32.mrb[0].mxu0
      %v1763 = vadd.f32 %v1498, %v1762
      %v1764 = vpop.f32.mrb[0].mxu0
      %v1765 = vpop.f32.mrb[0].mxu0
      %v1766 = vadd.f32 %v1498, %v1765
      %v1767 = vpop.f32.mrb[0].mxu0
      %1768 = vmatprep.mubr.bf16.mxu0 %v1440
      %1769 = vmatmul.mubr.bf16.gmra.mrb[0].mxu0 %v1312
      %v1770 = vpop.f32.mrb[0].mxu0
      %v1771 = vadd.f32 %v1498, %v1770
      %v1772 = vpop.f32.mrb[0].mxu0
      %v1773 = vpop.f32.mrb[0].mxu0
      %v1774 = vadd.f32 %v1498, %v1773
      %v1775 = vpop.f32.mrb[0].mxu0
      %1776 = vmatprep.mubr.bf16.mxu0 %v1443
      %1777 = vmatmul.mubr.bf16.gmra.mrb[0].mxu0 %v1315
      %v1778 = vpop.f32.mrb[0].mxu0
      %v1779 = vadd.f32 %v1498, %v1778
      %v1780 = vpop.f32.mrb[0].mxu0
      %v1781 = vpop.f32.mrb[0].mxu0
      %v1782 = vadd.f32 %v1498, %v1781
      %v1783 = vpop.f32.mrb[0].mxu0
      %1784 = vmatprep.mubr.bf16.mxu0 %v1446
      %1785 = vmatmul.mubr.bf16.gmra.mrb[0].mxu0 %v1318
      %v1786 = vpop.f32.mrb[0].mxu0
      %v1787 = vadd.f32 %v1498, %v1786
      %v1788 = vpop.f32.mrb[0].mxu0
      %v1789 = vpop.f32.mrb[0].mxu0
      %v1790 = vadd.f32 %v1498, %v1789
      %v1791 = vpop.f32.mrb[0].mxu0
      %1792 = vmatprep.mubr.bf16.mxu0 %v1449
      %1793 = vmatmul.mubr.bf16.gmra.mrb[0].mxu0 %v1321
      %v1794 = vpop.f32.mrb[0].mxu0
      %v1795 = vadd.f32 %v1498, %v1794
      %v1796 = vpop.f32.mrb[0].mxu0
      %v1797 = vpop.f32.mrb[0].mxu0
      %v1798 = vadd.f32 %v1498, %v1797
      %v1799 = vpop.f32.mrb[0].mxu0
      %1800 = vmatprep.mubr.bf16.mxu0 %v1452
      %1801 = vmatmul.mubr.bf16.gmra.mrb[0].mxu0 %v1324
      %v1802 = vpop.f32.mrb[0].mxu0
      %v1803 = vadd.f32 %v1498, %v1802
      %v1804 = vpop.f32.mrb[0].mxu0
      %v1805 = vpop.f32.mrb[0].mxu0
      %v1806 = vadd.f32 %v1498, %v1805
      %v1807 = vpop.f32.mrb[0].mxu0
      %1808 = vmatprep.mubr.bf16.mxu0 %v1455
      %1809 = vmatmul.mubr.bf16.gmra.mrb[0].mxu0 %v1327
      %v1810 = vpop.f32.mrb[0].mxu0
      %v1811 = vadd.f32 %v1498, %v1810
      %v1812 = vpop.f32.mrb[0].mxu0
      %v1813 = vpop.f32.mrb[0].mxu0
      %v1814 = vadd.f32 %v1498, %v1813
      %v1815 = vpop.f32.mrb[0].mxu0
      %1816 = vdwg.mxu0
      %1817 = vmatprep.subr.bf16.mxu0 0
      %1818 = vmatpush1.bf16.msra.mxu0 %v1588
      %1819 = vmatprep.subr.bf16.mxu0 0
      %1820 = vmatpush1.bf16.msra.mxu0 %v1589
      %1821 = vmatprep.subr.bf16.mxu0 0
      %1822 = vmatpush1.bf16.msra.mxu0 0
      %1823 = vmatprep.subr.bf16.mxu0 0
      %1824 = vmatpush1.bf16.msra.mxu0 0
      %1825 = vmatprep.subr.bf16.mxu0 0
      %1826 = vmatpush1.bf16.msra.mxu0 0
      %1827 = vmatprep.subr.bf16.mxu0 0
      %1828 = vmatpush1.bf16.msra.mxu0 0
      %1829 = vmatprep.subr.bf16.mxu0 0
      %1830 = vmatpush1.bf16.msra.mxu0 0
      %1831 = vmatprep.subr.bf16.mxu0 0
      %1832 = vmatpush1.bf16.msra.mxu0 0
      %1833 = vmatprep.subr.bf16.mxu0 0
      %1834 = vmatpush1.bf16.msra.mxu0 0
      %1835 = vmatprep.subr.bf16.mxu0 0
      %1836 = vmatpush1.bf16.msra.mxu0 0
      %1837 = vmatprep.subr.bf16.mxu0 0
      %1838 = vmatpush1.bf16.msra.mxu0 0
      %1839 = vmatprep.subr.bf16.mxu0 0
      %1840 = vmatpush1.bf16.msra.mxu0 0
      %1841 = vmatprep.subr.bf16.mxu0 0
      %1842 = vmatpush1.bf16.msra.mxu0 0
      %1843 = vmatprep.subr.bf16.mxu0 0
      %1844 = vmatpush1.bf16.msra.mxu0 0
      %1845 = vmatprep.subr.bf16.mxu0 0
      %1846 = vmatpush1.bf16.msra.mxu0 0
      %1847 = vmatprep.subr.bf16.mxu0 0
      %1848 = vmatpush1.bf16.msra.mxu0 0
      %1849 = vmatprep.mubr.bf16.mxu0 0
      %1850 = vmatmul.mubr.bf16.gmra.mrb[0].mxu0 %v1609
      %v1851 = vpop.f32.mrb[0].mxu0
      %v1852 = vadd.f32 %v1691, %v1851
      %v1853 = vpop.f32.mrb[0].mxu0
      %v1854 = vpop.f32.mrb[0].mxu0
      %v1855 = vadd.f32 %v1694, %v1854
      %v1856 = vpop.f32.mrb[0].mxu0
      %1857 = vmatprep.mubr.bf16.mxu0 0
      %1858 = vmatmul.mubr.bf16.gmra.mrb[0].mxu0 %v1612
      %v1859 = vpop.f32.mrb[0].mxu0
      %v1860 = vadd.f32 %v1699, %v1859
      %v1861 = vpop.f32.mrb[0].mxu0
      %v1862 = vpop.f32.mrb[0].mxu0
      %v1863 = vadd.f32 %v1702, %v1862
      %v1864 = vpop.f32.mrb[0].mxu0
      %1865 = vmatprep.mubr.bf16.mxu0 0
      %1866 = vmatmul.mubr.bf16.gmra.mrb[0].mxu0 %v1615
      %v1867 = vpop.f32.mrb[0].mxu0
      %v1868 = vadd.f32 %v1707, %v1867
      %v1869 = vpop.f32.mrb[0].mxu0
      %v1870 = vpop.f32.mrb[0].mxu0
      %v1871 = vadd.f32 %v1710, %v1870
      %v1872 = vpop.f32.mrb[0].mxu0
      %1873 = vmatprep.mubr.bf16.mxu0 0
      %1874 = vmatmul.mubr.bf16.gmra.mrb[0].mxu0 %v1618
      %v1875 = vpop.f32.mrb[0].mxu0
      %v1876 = vadd.f32 %v1715, %v1875
      %v1877 = vpop.f32.mrb[0].mxu0
      %v1878 = vpop.f32.mrb[0].mxu0
      %v1879 = vadd.f32 %v1718, %v1878
      %v1880 = vpop.f32.mrb[0].mxu0
      %1881 = vmatprep.mubr.bf16.mxu0 0
      %1882 = vmatmul.mubr.bf16.gmra.mrb[0].mxu0 %v1621
      %v1883 = vpop.f32.mrb[0].mxu0
      %v1884 = vadd.f32 %v1723, %v1883
      %v1885 = vpop.f32.mrb[0].mxu0
      %v1886 = vpop.f32.mrb[0].mxu0
      %v1887 = vadd.f32 %v1726, %v1886
      %v1888 = vpop.f32.mrb[0].mxu0
      %1889 = vmatprep.mubr.bf16.mxu0 0
      %1890 = vmatmul.mubr.bf16.gmra.mrb[0].mxu0 %v1624
      %v1891 = vpop.f32.mrb[0].mxu0
      %v1892 = vadd.f32 %v1731, %v1891
      %v1893 = vpop.f32.mrb[0].mxu0
      %v1894 = vpop.f32.mrb[0].mxu0
      %v1895 = vadd.f32 %v1734, %v1894
      %v1896 = vpop.f32.mrb[0].mxu0
      %1897 = vmatprep.mubr.bf16.mxu0 0
      %1898 = vmatmul.mubr.bf16.gmra.mrb[0].mxu0 %v1627
      %v1899 = vpop.f32.mrb[0].mxu0
      %v1900 = vadd.f32 %v1739, %v1899
      %v1901 = vpop.f32.mrb[0].mxu0
      %v1902 = vpop.f32.mrb[0].mxu0
      %v1903 = vadd.f32 %v1742, %v1902
      %v1904 = vpop.f32.mrb[0].mxu0
      %1905 = vmatprep.mubr.bf16.mxu0 0
      %1906 = vmatmul.mubr.bf16.gmra.mrb[0].mxu0 %v1630
      %v1907 = vpop.f32.mrb[0].mxu0
      %v1908 = vadd.f32 %v1747, %v1907
      %v1909 = vpop.f32.mrb[0].mxu0
      %v1910 = vpop.f32.mrb[0].mxu0
      %v1911 = vadd.f32 %v1750, %v1910
      %v1912 = vpop.f32.mrb[0].mxu0
      %1913 = vmatprep.mubr.bf16.mxu0 0
      %1914 = vmatmul.mubr.bf16.gmra.mrb[0].mxu0 %v1633
      %v1915 = vpop.f32.mrb[0].mxu0
      %v1916 = vadd.f32 %v1755, %v1915
      %v1917 = vpop.f32.mrb[0].mxu0
      %v1918 = vpop.f32.mrb[0].mxu0
      %v1919 = vadd.f32 %v1758, %v1918
      %v1920 = vpop.f32.mrb[0].mxu0
      %1921 = vmatprep.mubr.bf16.mxu0 0
      %1922 = vmatmul.mubr.bf16.gmra.mrb[0].mxu0 %v1636
      %v1923 = vpop.f32.mrb[0].mxu0
      %v1924 = vadd.f32 %v1763, %v1923
      %v1925 = vpop.f32.mrb[0].mxu0
      %v1926 = vpop.f32.mrb[0].mxu0
      %v1927 = vadd.f32 %v1766, %v1926
      %v1928 = vpop.f32.mrb[0].mxu0
      %1929 = vmatprep.mubr.bf16.mxu0 0
      %1930 = vmatmul.mubr.bf16.gmra.mrb[0].mxu0 %v1639
      %v1931 = vpop.f32.mrb[0].mxu0
      %v1932 = vadd.f32 %v1771, %v1931
      %v1933 = vpop.f32.mrb[0].mxu0
      %v1934 = vpop.f32.mrb[0].mxu0
      %v1935 = vadd.f32 %v1774, %v1934
      %v1936 = vpop.f32.mrb[0].mxu0
      %1937 = vmatprep.mubr.bf16.mxu0 0
      %1938 = vmatmul.mubr.bf16.gmra.mrb[0].mxu0 %v1642
      %v1939 = vpop.f32.mrb[0].mxu0
      %v1940 = vadd.f32 %v1779, %v1939
      %v1941 = vpop.f32.mrb[0].mxu0
      %v1942 = vpop.f32.mrb[0].mxu0
      %v1943 = vadd.f32 %v1782, %v1942
      %v1944 = vpop.f32.mrb[0].mxu0
      %1945 = vmatprep.mubr.bf16.mxu0 0
      %1946 = vmatmul.mubr.bf16.gmra.mrb[0].mxu0 %v1645
      %v1947 = vpop.f32.mrb[0].mxu0
      %v1948 = vadd.f32 %v1787, %v1947
      %v1949 = vpop.f32.mrb[0].mxu0
      %v1950 = vpop.f32.mrb[0].mxu0
      %v1951 = vadd.f32 %v1790, %v1950
      %v1952 = vpop.f32.mrb[0].mxu0
      %1953 = vmatprep.mubr.bf16.mxu0 0
      %1954 = vmatmul.mubr.bf16.gmra.mrb[0].mxu0 %v1648
      %v1955 = vpop.f32.mrb[0].mxu0
      %v1956 = vadd.f32 %v1795, %v1955
      %v1957 = vpop.f32.mrb[0].mxu0
      %v1958 = vpop.f32.mrb[0].mxu0
      %v1959 = vadd.f32 %v1798, %v1958
      %v1960 = vpop.f32.mrb[0].mxu0
      %1961 = vmatprep.mubr.bf16.mxu0 0
      %1962 = vmatmul.mubr.bf16.gmra.mrb[0].mxu0 %v1651
      %v1963 = vpop.f32.mrb[0].mxu0
      %v1964 = vadd.f32 %v1803, %v1963
      %v1965 = vpop.f32.mrb[0].mxu0
      %v1966 = vpop.f32.mrb[0].mxu0
      %v1967 = vadd.f32 %v1806, %v1966
      %v1968 = vpop.f32.mrb[0].mxu0
      %1969 = vmatprep.mubr.bf16.mxu0 0
      %1970 = vmatmul.mubr.bf16.gmra.mrb[0].mxu0 %v1654
      %v1971 = vpop.f32.mrb[0].mxu0
      %v1972 = vadd.f32 %v1811, %v1971
      %v1973 = vpop.f32.mrb[0].mxu0
      %v1974 = vpop.f32.mrb[0].mxu0
      %v1975 = vadd.f32 %v1814, %v1974
      %v1976 = vpop.f32.mrb[0].mxu0
      %1977 = vdwg.mxu0
      %v1978 = vpack.c.bf16 %v1855, %v1852
      %v1979 = vpack.c.bf16 %v1863, %v1860
      %v1980 = vpack.c.bf16 %v1871, %v1868
      %v1981 = vpack.c.bf16 %v1879, %v1876
      %v1982 = vpack.c.bf16 %v1887, %v1884
      %v1983 = vpack.c.bf16 %v1895, %v1892
      %v1984 = vpack.c.bf16 %v1903, %v1900
      %v1985 = vpack.c.bf16 %v1911, %v1908
      %v1986 = vpack.c.bf16 %v1919, %v1916
      %v1987 = vpack.c.bf16 %v1927, %v1924
      %v1988 = vpack.c.bf16 %v1935, %v1932
      %v1989 = vpack.c.bf16 %v1943, %v1940
      %v1990 = vpack.c.bf16 %v1951, %v1948
      %v1991 = vpack.c.bf16 %v1959, %v1956
      %v1992 = vpack.c.bf16 %v1967, %v1964
      %v1993 = vpack.c.bf16 %v1975, %v1972
      %v2010 = vunpack.c.l.b16 %v1978
      %v2011 = vunpack.c.h.b16 %v1978
      %v2012 = vunpack.c.l.b16 %v1979
      %v2013 = vunpack.c.h.b16 %v1979
      %v2014 = vunpack.c.l.b16 %v1980
      %v2015 = vunpack.c.h.b16 %v1980
      %v2016 = vunpack.c.l.b16 %v1981
      %v2017 = vunpack.c.h.b16 %v1981
      %v2018 = vunpack.c.l.b16 %v1982
      %v2019 = vunpack.c.h.b16 %v1982
      %v2020 = vunpack.c.l.b16 %v1983
      %v2021 = vunpack.c.h.b16 %v1983
      %v2022 = vunpack.c.l.b16 %v1984
      %v2023 = vunpack.c.h.b16 %v1984
      %v2024 = vunpack.c.l.b16 %v1985
      %v2025 = vunpack.c.h.b16 %v1985
      %v2026 = vunpack.c.l.b16 %v1986
      %v2027 = vunpack.c.h.b16 %v1986
      %v2028 = vunpack.c.l.b16 %v1987
      %v2029 = vunpack.c.h.b16 %v1987
      %v2030 = vunpack.c.l.b16 %v1988
      %v2031 = vunpack.c.h.b16 %v1988
      %v2032 = vunpack.c.l.b16 %v1989
      %v2033 = vunpack.c.h.b16 %v1989
      %v2034 = vunpack.c.l.b16 %v1990
      %v2035 = vunpack.c.h.b16 %v1990
      %v2036 = vunpack.c.l.b16 %v1991
      %v2037 = vunpack.c.h.b16 %v1991
      %v2038 = vunpack.c.l.b16 %v1992
      %v2039 = vunpack.c.h.b16 %v1992
      %v2040 = vunpack.c.l.b16 %v1993
      %v2041 = vunpack.c.h.b16 %v1993
      %v2042 = vpack.c.b16 %v2010, %v2010
      %v2043 = vpack.c.b16 %v2011, %v2011
      %v2044 = vpack.c.b16 %v2012, %v2012
      %v2045 = vpack.c.b16 %v2013, %v2013
      %v2046 = vpack.c.b16 %v2014, %v2014
      %v2047 = vpack.c.b16 %v2015, %v2015
      %v2048 = vpack.c.b16 %v2016, %v2016
      %v2049 = vpack.c.b16 %v2017, %v2017
      %v2050 = vpack.c.b16 %v2018, %v2018
      %v2051 = vpack.c.b16 %v2019, %v2019
      %v2052 = vpack.c.b16 %v2020, %v2020
      %v2053 = vpack.c.b16 %v2021, %v2021
      %v2054 = vpack.c.b16 %v2022, %v2022
      %v2055 = vpack.c.b16 %v2023, %v2023
      %v2056 = vpack.c.b16 %v2024, %v2024
      %v2057 = vpack.c.b16 %v2025, %v2025
      %v2058 = vpack.c.b16 %v2026, %v2026
      %v2059 = vpack.c.b16 %v2027, %v2027
      %v2060 = vpack.c.b16 %v2028, %v2028
      %v2061 = vpack.c.b16 %v2029, %v2029
      %v2062 = vpack.c.b16 %v2030, %v2030
      %v2063 = vpack.c.b16 %v2031, %v2031
      %v2064 = vpack.c.b16 %v2032, %v2032
      %v2065 = vpack.c.b16 %v2033, %v2033
      %v2066 = vpack.c.b16 %v2034, %v2034
      %v2067 = vpack.c.b16 %v2035, %v2035
      %v2068 = vpack.c.b16 %v2036, %v2036
      %v2069 = vpack.c.b16 %v2037, %v2037
      %v2070 = vpack.c.b16 %v2038, %v2038
      %v2071 = vpack.c.b16 %v2039, %v2039
      %v2072 = vpack.c.b16 %v2040, %v2040
      %v2073 = vpack.c.b16 %v2041, %v2041
      %2106 = vst [vmem:[%s170] sm:$0xf] %v2042
      %2107 = vst [vmem:[%s170 + $0x4] sm:$0xf] %v2043
      %2108 = vst [vmem:[%s170 + $0x8] sm:$0xf] %v2044
      %2109 = vst [vmem:[%s170 + $0xc] sm:$0xf] %v2045
      %2110 = vst [vmem:[%s170 + $0x10] sm:$0xf] %v2046
      %2111 = vst [vmem:[%s170 + $0x14] sm:$0xf] %v2047
      %2112 = vst [vmem:[%s170 + $0x18] sm:$0xf] %v2048
      %2113 = vst [vmem:[%s170 + $0x1c] sm:$0xf] %v2049
      %2114 = vst [vmem:[%s170 + $0x20] sm:$0xf] %v2050
      %2115 = vst [vmem:[%s170 + $0x24] sm:$0xf] %v2051
      %2116 = vst [vmem:[%s170 + $0x28] sm:$0xf] %v2052
      %2117 = vst [vmem:[%s170 + $0x2c] sm:$0xf] %v2053
      %2118 = vst [vmem:[%s170 + $0x30] sm:$0xf] %v2054
      %2119 = vst [vmem:[%s170 + $0x34] sm:$0xf] %v2055
      %2120 = vst [vmem:[%s170 + $0x38] sm:$0xf] %v2056
      %2121 = vst [vmem:[%s170 + $0x3c] sm:$0xf] %v2057
      %2122 = vst [vmem:[%s170 + $0x40] sm:$0xf] %v2058
      %2123 = vst [vmem:[%s170 + $0x44] sm:$0xf] %v2059
      %2124 = vst [vmem:[%s170 + $0x48] sm:$0xf] %v2060
      %2125 = vst [vmem:[%s170 + $0x4c] sm:$0xf] %v2061
      %2126 = vst [vmem:[%s170 + $0x50] sm:$0xf] %v2062
      %2127 = vst [vmem:[%s170 + $0x54] sm:$0xf] %v2063
      %2128 = vst [vmem:[%s170 + $0x58] sm:$0xf] %v2064
      %2129 = vst [vmem:[%s170 + $0x5c] sm:$0xf] %v2065
      %2130 = vst [vmem:[%s170 + $0x60] sm:$0xf] %v2066
      %2131 = vst [vmem:[%s170 + $0x64] sm:$0xf] %v2067
      %2132 = vst [vmem:[%s170 + $0x68] sm:$0xf] %v2068
      %2133 = vst [vmem:[%s170 + $0x6c] sm:$0xf] %v2069
      %2134 = vst [vmem:[%s170 + $0x70] sm:$0xf] %v2070
      %2135 = vst [vmem:[%s170 + $0x74] sm:$0xf] %v2071
      %2136 = vst [vmem:[%s170 + $0x78] sm:$0xf] %v2072
      %2137 = vst [vmem:[%s170 + $0x7c] sm:$0xf] %v2073
      %p2138 = scmp.lt.s32.totalorder %s14, 1
      %s2139 = scalar_select %p2138, %s14, 1
      %s2140 = smul.addr %s2139, 32
      %s2141 = smul.addr %s2140, 4
      %s2142 = scalar_lea.vmem %s3, %s2141
      // Predicated region
      $region33: #{_lambda_.1} parent=31 // pred_check
        %p2143 = pneg %p100
      $region34: #{_lambda_.1} parent=31 // pred_check_branch
        %2145 = sbr.rel (%p2143) target = $region36
      $region35: #{_lambda_.1} parent=31 // pred_region
        _
      $region36: #{_lambda_.1} parent=31 // pred_fallthru
        _
    $region32: #{_lambda_.1} parent=5 // pred_fallthru
      _
    %p2146 = scmp.le.s32.totalorder 2, %s9
    // Predicated region
    $region37: #{_lambda_.1} parent=5 // pred_check
      %p2147 = pneg %p2146
    $region38: #{_lambda_.1} parent=5 // pred_check_branch
      %2149 = sbr.rel (%p2147) target = $region40
    $region39: #{_lambda_.1} parent=5 // pred_region
      %s2150 = ssub.s32 %s9, 2
      // Predicated region
      $region41: #{_lambda_.1} parent=39 // pred_check
        %p2151 = pneg %p106
      $region42: #{_lambda_.1} parent=39 // pred_check_branch
        %2153 = sbr.rel (%p2151) target = $region44
      $region43: #{_lambda_.1} parent=39 // pred_region
        %p2154 = scmp.lt.s32.totalorder %s15, 1
        %s2155 = scalar_select %p2154, %s15, 1
        %s2156 = smul.addr %s2155, 32
        %s2157 = smul.addr %s2156, 4
        %s2158 = scalar_lea.vmem %s3, %s2157
      $region44: #{_lambda_.1} parent=39 // pred_fallthru
        _
    $region40: #{_lambda_.1} parent=5 // pred_fallthru
      _
  $region6: #{_lambda_.1} parent=0 // loop_footer
    %s13 = sadd.s32 1, %s9
  $region7: #{_lambda_.1} parent=0 // loop_footer_branch
    %8 = sbr.rel target = $region3
  $region8: #{_lambda_.1} parent=0 // loop_exit
    _

</llo_original>
